<compile_context>
chip_gen: v5e
topology: v5e:2x2
jax: 0.10.0
libtpu: 0.0.40
codegen_flags: <defaults>
</compile_context>

<pallas_src>
import jax
import jax.numpy as jnp
from jax.experimental import pallas as pl
from jax.experimental.pallas import tpu as pltpu

_BN_EPS = 1e-5


def _round_up(x, m):
    return ((x + m - 1) // m) * m


def _vmem_limit_bytes():
    cap = 128 * 1024 * 1024
    try:
        cap = int(pltpu.get_tpu_info().vmem_capacity_bytes)
    except Exception:
        pass
    # ~half of per-TC VMEM, capped: 32 MiB on v7x (64 MiB/TC), 64 MiB on v5e/v6e.
    return max(16 * 1024 * 1024, min(cap // 2, 64 * 1024 * 1024))


# ----------------------------------------------------------------------------
# Pallas kernel: fused 3x3 conv (kx folded into K) + bias/BN scale/shift + ReLU
# ----------------------------------------------------------------------------

def _conv3x3_bn_relu_kernel(x_ref, w_ref, scale_ref, shift_ref, o_ref):
    # x_ref     : (1, TH+2, Wp, K3)  bf16  halo-overlapped row stripe (kx folded)
    # w_ref     : (3, K3, TN)        bf16  ky-major, (kx, cin)-folded weights
    # scale_ref : (1, TN)            f32   folded BN gamma / sqrt(var+eps)
    # shift_ref : (1, TN)            f32   folded BN beta + (bias-mean)*scale
    # o_ref     : (1, TH, Wp, TN)          output row tile
    _, TH, Wp, TN = o_ref.shape
    K3 = w_ref.shape[1]

    acc = None
    for ky in range(3):                      # 3 MXU matmuls, each K = 3*Cin_p
        patch = x_ref[0, ky:ky + TH, :, :].reshape(TH * Wp, K3)
        part = jnp.dot(patch, w_ref[ky], preferred_element_type=jnp.float32)
        acc = part if acc is None else acc + part

    y = jnp.maximum(acc * scale_ref[...] + shift_ref[...], 0.0)
    o_ref[...] = y.reshape(1, TH, Wp, TN).astype(o_ref.dtype)


def conv3x3_bn_relu(x_nhwc, p, *, out_dtype=jnp.float32, m_target=1024):
    """Fused Conv2d(3x3, pad=1) + BatchNorm (running stats) + ReLU.

    x_nhwc: (N, H, W, Cin)  ->  (N, H, W, Cout)
    """
    N, H, W, Cin = x_nhwc.shape
    Cout = p["w"].shape[0]

    Cin_p = _round_up(Cin, 16)           # bf16 sublane packing on the weight K dim
    K3 = 3 * Cin_p                       # folded contraction depth
    Cout_p = _round_up(Cout, 128)        # lane-dense output stores
    tn = 256 if Cout_p % 256 == 0 else 128

    Hp = _round_up(H, 8)
    Wp = _round_up(W, 8)

    # Row tile: largest divisor of Hp with TH * Wp <= m_target matmul rows/step.
    TH = 1
    for cand in range(1, Hp + 1):
        if Hp % cand == 0 and cand * Wp <= m_target:
            TH = cand
    nR = Hp // TH

    # Fold conv bias + BatchNorm (inference running stats) into scale / shift.
    scale = p["gamma"] / jnp.sqrt(p["var"] + _BN_EPS)
    shift = p["beta"] + (p["b"] - p["mean"]) * scale
    scale_p = jnp.pad(scale, (0, Cout_p - Cout), constant_values=1.0)
    shift_p = jnp.pad(shift, (0, Cout_p - Cout))
    scale_p = scale_p.reshape(1, Cout_p).astype(jnp.float32)
    shift_p = shift_p.reshape(1, Cout_p).astype(jnp.float32)

    # Weights: (Cout, Cin, 3, 3) -> (3, 3*Cin_p, Cout_p); w3[ky, kx*Cin_p+c, o].
    w_t = jnp.transpose(p["w"], (2, 3, 1, 0))            # (ky, kx, Cin, Cout)
    w_t = jnp.pad(w_t, ((0, 0), (0, 0), (0, Cin_p - Cin), (0, Cout_p - Cout)))
    w3 = w_t.reshape(3, K3, Cout_p).astype(jnp.bfloat16)

    # Spatial halo (= Conv2d padding=1) + H/W alignment padding + channel pad.
    xp = jnp.pad(x_nhwc, ((0, 0), (1, 1 + Hp - H), (1, 1 + Wp - W),
                          (0, Cin_p - Cin))).astype(jnp.bfloat16)
    # (N, Hp+2, Wp+2, Cin_p)

    # Width-wise im2col: fold kx into the channel (contraction) dim.
    xw = jnp.concatenate([xp[:, :, kx:kx + Wp, :] for kx in range(3)], axis=-1)
    # (N, Hp+2, Wp, K3)

    # Halo-overlapped row stripes, flattened to (N*nR, TH+2, Wp, K3).
    xs = jnp.stack([xw[:, r * TH:r * TH + TH + 2] for r in range(nR)], axis=1)
    xs = xs.reshape(N * nR, TH + 2, Wp, K3)

    # Row-tiles innermost: weight/scale/shift tiles stay resident across rows.
    grid = (N, Cout_p // tn, nR)
    out = pl.pallas_call(
        _conv3x3_bn_relu_kernel,
        out_shape=jax.ShapeDtypeStruct((N, Hp, Wp, Cout_p), out_dtype),
        grid_spec=pltpu.PrefetchScalarGridSpec(
            num_scalar_prefetch=0,
            grid=grid,
            in_specs=[
                pl.BlockSpec((1, TH + 2, Wp, K3),
                             lambda b, j, r: (b * nR + r, 0, 0, 0)),
                pl.BlockSpec((3, K3, tn), lambda b, j, r: (0, 0, j)),
                pl.BlockSpec((1, tn), lambda b, j, r: (0, j)),
                pl.BlockSpec((1, tn), lambda b, j, r: (0, j)),
            ],
            out_specs=pl.BlockSpec((1, TH, Wp, tn),
                                   lambda b, j, r: (b, r, 0, j)),
        ),
        compiler_params=pltpu.CompilerParams(
            dimension_semantics=("parallel", "parallel", "parallel"),
            vmem_limit_bytes=_vmem_limit_bytes()),
    )(xs, w3, scale_p, shift_p)
    return out[:, :H, :W, :Cout]


# ----------------------------------------------------------------------------
# DoubleConv forward (public API: NCHW in / NCHW out, like the PyTorch module)
# ----------------------------------------------------------------------------

def double_conv(x_nchw, params):
    x = jnp.transpose(x_nchw, (0, 2, 3, 1))                       # NHWC
    # conv1 output stays bf16 (it only feeds conv2); conv2 output is f32.
    y = conv3x3_bn_relu(x, params["c1"], out_dtype=jnp.bfloat16)
    y = conv3x3_bn_relu(y, params["c2"], out_dtype=jnp.float32)
    return jnp.transpose(y, (0, 3, 1, 2))                         # NCHW


# ----------------------------------------------------------------------------
# Deterministic parameter init (PyTorch-default-like uniform bounds)
# ----------------------------------------------------------------------------

def _init_conv_bn(key, cin, cout):
    wk, bk = jax.random.split(key)
    bound = 1.0 / float((cin * 9) ** 0.5)
    w = jax.random.uniform(wk, (cout, cin, 3, 3), jnp.float32, -bound, bound)
    b = jax.random.uniform(bk, (cout,), jnp.float32, -bound, bound)
    return {"w": w, "b": b,
            "gamma": jnp.ones((cout,), jnp.float32),
            "beta": jnp.zeros((cout,), jnp.float32),
            "mean": jnp.zeros((cout,), jnp.float32),
            "var": jnp.ones((cout,), jnp.float32)}


def init_double_conv_params(key, in_channels, out_channels, mid_channels=None):
    if mid_channels is None:
        mid_channels = out_channels
    k1, k2 = jax.random.split(key)
    return {"c1": _init_conv_bn(k1, in_channels, mid_channels),
            "c2": _init_conv_bn(k2, mid_channels, out_channels)}


# ----------------------------------------------------------------------------
# Pure-JAX reference (f32) for a correctness check
# ----------------------------------------------------------------------------

def double_conv_reference(x_nchw, params):
    x = jnp.transpose(x_nchw, (0, 2, 3, 1)).astype(jnp.float32)
    for p in (params["c1"], params["c2"]):
        w = jnp.transpose(p["w"], (2, 3, 1, 0))                   # HWIO
        y = jax.lax.conv_general_dilated(
            x, w, window_strides=(1, 1), padding="SAME",
            dimension_numbers=("NHWC", "HWIO", "NHWC"),
            precision=jax.lax.Precision.HIGHEST)
        scale = p["gamma"] / jnp.sqrt(p["var"] + _BN_EPS)
        shift = p["beta"] + (p["b"] - p["mean"]) * scale
        x = jnp.maximum(y * scale + shift, 0.0)
    return jnp.transpose(x, (0, 3, 1, 2))


# ----------------------------------------------------------------------------
# Main
# ----------------------------------------------------------------------------

if __name__ == "__main__":
    root = jax.random.PRNGKey(0)
    kp, kx, kp2, kx2 = jax.random.split(root, 4)

    # Primary small case.
    B, CIN, COUT, H, W = 2, 4, 32, 16, 16
    params = init_double_conv_params(kp, CIN, COUT)
    x = jax.random.normal(kx, (B, CIN, H, W), jnp.float32)

    fwd = jax.jit(double_conv)
    y = fwd(x, params)
    jax.block_until_ready(y)
    assert y.shape == (B, COUT, H, W), y.shape
    y_ref = double_conv_reference(x, params)
    err = float(jnp.max(jnp.abs(y.astype(jnp.float32) - y_ref)))
    assert err < 5e-2, f"max abs error vs reference too large: {err}"

    # Second case: non-multiple-of-8 spatial size + multiple row stripes
    # (exercises H/W alignment padding and the flattened (batch, stripe) map).
    B2, CIN2, COUT2, H2, W2 = 1, 3, 8, 36, 36
    params2 = init_double_conv_params(kp2, CIN2, COUT2, mid_channels=16)
    x2 = jax.random.normal(kx2, (B2, CIN2, H2, W2), jnp.float32)
    y2 = jax.jit(double_conv)(x2, params2)
    jax.block_until_ready(y2)
    assert y2.shape == (B2, COUT2, H2, W2), y2.shape
    y2_ref = double_conv_reference(x2, params2)
    err2 = float(jnp.max(jnp.abs(y2.astype(jnp.float32) - y2_ref)))
    assert err2 < 5e-2, f"max abs error vs reference too large: {err2}"

    print("KERNEL_OK")
</pallas_src>

<mosaic_0001>
module attributes {stable_mosaic.version = 11 : i64} {
  func.func @_conv3x3_bn_relu_kernel(%arg0: i32, %arg1: i32, %arg2: i32, %arg3: memref<1x18x16x48xbf16, #tpu.memory_space<vmem>>, %arg4: memref<3x48x128xbf16, #tpu.memory_space<vmem>>, %arg5: memref<1x128xf32, #tpu.memory_space<vmem>>, %arg6: memref<1x128xf32, #tpu.memory_space<vmem>>, %arg7: memref<1x16x16x128xbf16, #tpu.memory_space<vmem>>) attributes {dimension_semantics = [#tpu.dimension_semantics<parallel>, #tpu.dimension_semantics<parallel>, #tpu.dimension_semantics<parallel>], iteration_bounds = array<i64: 2, 1, 1>, scalar_prefetch = 0 : i64, scratch_operands = 0 : i64, tpu.core_type = #tpu.core_type<tc>, window_params = [{transform_indices = @transform_0, window_bounds = array<i64: 1, 18, 16, 48>}, {transform_indices = @transform_1, window_bounds = array<i64: 3, 48, 128>}, {transform_indices = @transform_2, window_bounds = array<i64: 1, 128>}, {transform_indices = @transform_3, window_bounds = array<i64: 1, 128>}, {transform_indices = @transform_4, window_bounds = array<i64: 1, 16, 16, 128>}]} {
    %c0 = arith.constant 0 : index
    %c0_0 = arith.constant 0 : index
    %c0_1 = arith.constant 0 : index
    %c0_2 = arith.constant 0 : index
    %0 = vector.load %arg3[%c0, %c0_0, %c0_1, %c0_2] : memref<1x18x16x48xbf16, #tpu.memory_space<vmem>>, vector<1x16x16x48xbf16>
    %1 = vector.shape_cast %0 : vector<1x16x16x48xbf16> to vector<16x16x48xbf16>
    %2 = vector.shape_cast %1 : vector<16x16x48xbf16> to vector<256x48xbf16>
    %c0_3 = arith.constant 0 : index
    %c0_4 = arith.constant 0 : index
    %c0_5 = arith.constant 0 : index
    %3 = vector.load %arg4[%c0_3, %c0_4, %c0_5] : memref<3x48x128xbf16, #tpu.memory_space<vmem>>, vector<1x48x128xbf16>
    %4 = vector.shape_cast %3 : vector<1x48x128xbf16> to vector<48x128xbf16>
    %cst = arith.constant dense<0.000000e+00> : vector<256x128xf32>
    %5 = tpu.matmul %2, %4, %cst {dimension_numbers = #tpu.dot_dimension_numbers<[1], [0], [0], [1], [0, 0, 1, 1], [], []>} : vector<256x48xbf16>, vector<48x128xbf16>, vector<256x128xf32> -> vector<256x128xf32>
    %c0_6 = arith.constant 0 : index
    %c1 = arith.constant 1 : index
    %c0_7 = arith.constant 0 : index
    %c0_8 = arith.constant 0 : index
    %6 = vector.load %arg3[%c0_6, %c1, %c0_7, %c0_8] : memref<1x18x16x48xbf16, #tpu.memory_space<vmem>>, vector<1x16x16x48xbf16>
    %7 = vector.shape_cast %6 : vector<1x16x16x48xbf16> to vector<16x16x48xbf16>
    %8 = vector.shape_cast %7 : vector<16x16x48xbf16> to vector<256x48xbf16>
    %c1_9 = arith.constant 1 : index
    %c0_10 = arith.constant 0 : index
    %c0_11 = arith.constant 0 : index
    %9 = vector.load %arg4[%c1_9, %c0_10, %c0_11] : memref<3x48x128xbf16, #tpu.memory_space<vmem>>, vector<1x48x128xbf16>
    %10 = vector.shape_cast %9 : vector<1x48x128xbf16> to vector<48x128xbf16>
    %cst_12 = arith.constant dense<0.000000e+00> : vector<256x128xf32>
    %11 = tpu.matmul %8, %10, %cst_12 {dimension_numbers = #tpu.dot_dimension_numbers<[1], [0], [0], [1], [0, 0, 1, 1], [], []>} : vector<256x48xbf16>, vector<48x128xbf16>, vector<256x128xf32> -> vector<256x128xf32>
    %12 = arith.addf %5, %11 : vector<256x128xf32>
    %c0_13 = arith.constant 0 : index
    %c2 = arith.constant 2 : index
    %c0_14 = arith.constant 0 : index
    %c0_15 = arith.constant 0 : index
    %13 = vector.load %arg3[%c0_13, %c2, %c0_14, %c0_15] : memref<1x18x16x48xbf16, #tpu.memory_space<vmem>>, vector<1x16x16x48xbf16>
    %14 = vector.shape_cast %13 : vector<1x16x16x48xbf16> to vector<16x16x48xbf16>
    %15 = vector.shape_cast %14 : vector<16x16x48xbf16> to vector<256x48xbf16>
    %c2_16 = arith.constant 2 : index
    %c0_17 = arith.constant 0 : index
    %c0_18 = arith.constant 0 : index
    %16 = vector.load %arg4[%c2_16, %c0_17, %c0_18] : memref<3x48x128xbf16, #tpu.memory_space<vmem>>, vector<1x48x128xbf16>
    %17 = vector.shape_cast %16 : vector<1x48x128xbf16> to vector<48x128xbf16>
    %cst_19 = arith.constant dense<0.000000e+00> : vector<256x128xf32>
    %18 = tpu.matmul %15, %17, %cst_19 {dimension_numbers = #tpu.dot_dimension_numbers<[1], [0], [0], [1], [0, 0, 1, 1], [], []>} : vector<256x48xbf16>, vector<48x128xbf16>, vector<256x128xf32> -> vector<256x128xf32>
    %19 = arith.addf %12, %18 : vector<256x128xf32>
    %c0_20 = arith.constant 0 : index
    %c0_21 = arith.constant 0 : index
    %20 = vector.load %arg5[%c0_20, %c0_21] : memref<1x128xf32, #tpu.memory_space<vmem>>, vector<1x128xf32>
    %21 = vector.broadcast %20 : vector<1x128xf32> to vector<256x128xf32>
    %22 = arith.mulf %19, %21 : vector<256x128xf32>
    %c0_22 = arith.constant 0 : index
    %c0_23 = arith.constant 0 : index
    %23 = vector.load %arg6[%c0_22, %c0_23] : memref<1x128xf32, #tpu.memory_space<vmem>>, vector<1x128xf32>
    %24 = vector.broadcast %23 : vector<1x128xf32> to vector<256x128xf32>
    %25 = arith.addf %22, %24 : vector<256x128xf32>
    %cst_24 = arith.constant 0.000000e+00 : f32
    %26 = vector.broadcast %cst_24 : f32 to vector<256x128xf32>
    %27 = arith.maximumf %25, %26 : vector<256x128xf32>
    %28 = vector.shape_cast %27 : vector<256x128xf32> to vector<1x16x16x128xf32>
    %29 = arith.truncf %28 : vector<1x16x16x128xf32> to vector<1x16x16x128xbf16>
    %c0_25 = arith.constant 0 : index
    %c0_26 = arith.constant 0 : index
    %c0_27 = arith.constant 0 : index
    %c0_28 = arith.constant 0 : index
    %30 = vector.load %arg7[%c0_25, %c0_26, %c0_27, %c0_28] : memref<1x16x16x128xbf16, #tpu.memory_space<vmem>>, vector<1x16x16x128xbf16>
    tpu.vector_store %arg7[%c0_25, %c0_26, %c0_27, %c0_28], %29 {strides = array<i32>} : memref<1x16x16x128xbf16, #tpu.memory_space<vmem>>, vector<1x16x16x128xbf16>,
    return
  }
  func.func @transform_0(%arg0: i32, %arg1: i32, %arg2: i32) -> (i32, i32, i32, i32) {
    %c1_i32 = arith.constant 1 : i32
    %0 = arith.muli %arg0, %c1_i32 : i32
    %1 = arith.addi %0, %arg2 : i32
    %c0_i32 = arith.constant 0 : i32
    %c0_i32_0 = arith.constant 0 : i32
    %c0_i32_1 = arith.constant 0 : i32
    %c0_i32_2 = arith.constant 0 : i32
    return %1, %c0_i32, %c0_i32_0, %c0_i32_1 : i32, i32, i32, i32
  }
  func.func @transform_1(%arg0: i32, %arg1: i32, %arg2: i32) -> (i32, i32, i32) {
    %c0_i32 = arith.constant 0 : i32
    %c0_i32_0 = arith.constant 0 : i32
    %c0_i32_1 = arith.constant 0 : i32
    return %c0_i32, %c0_i32_0, %arg1 : i32, i32, i32
  }
  func.func @transform_2(%arg0: i32, %arg1: i32, %arg2: i32) -> (i32, i32) {
    %c0_i32 = arith.constant 0 : i32
    %c0_i32_0 = arith.constant 0 : i32
    return %c0_i32, %arg1 : i32, i32
  }
  func.func @transform_3(%arg0: i32, %arg1: i32, %arg2: i32) -> (i32, i32) {
    %c0_i32 = arith.constant 0 : i32
    %c0_i32_0 = arith.constant 0 : i32
    return %c0_i32, %arg1 : i32, i32
  }
  func.func @transform_4(%arg0: i32, %arg1: i32, %arg2: i32) -> (i32, i32, i32, i32) {
    %c0_i32 = arith.constant 0 : i32
    %c0_i32_0 = arith.constant 0 : i32
    return %arg0, %arg2, %c0_i32, %arg1 : i32, i32, i32, i32
  }
}

module attributes {stable_mosaic.version = 11 : i64} {
  func.func @_conv3x3_bn_relu_kernel(%arg0: i32, %arg1: i32, %arg2: i32, %arg3: memref<1x18x16x96xbf16, #tpu.memory_space<vmem>>, %arg4: memref<3x96x128xbf16, #tpu.memory_space<vmem>>, %arg5: memref<1x128xf32, #tpu.memory_space<vmem>>, %arg6: memref<1x128xf32, #tpu.memory_space<vmem>>, %arg7: memref<1x16x16x128xf32, #tpu.memory_space<vmem>>) attributes {dimension_semantics = [#tpu.dimension_semantics<parallel>, #tpu.dimension_semantics<parallel>, #tpu.dimension_semantics<parallel>], iteration_bounds = array<i64: 2, 1, 1>, scalar_prefetch = 0 : i64, scratch_operands = 0 : i64, tpu.core_type = #tpu.core_type<tc>, window_params = [{transform_indices = @transform_0, window_bounds = array<i64: 1, 18, 16, 96>}, {transform_indices = @transform_1, window_bounds = array<i64: 3, 96, 128>}, {transform_indices = @transform_2, window_bounds = array<i64: 1, 128>}, {transform_indices = @transform_3, window_bounds = array<i64: 1, 128>}, {transform_indices = @transform_4, window_bounds = array<i64: 1, 16, 16, 128>}]} {
    %c0 = arith.constant 0 : index
    %c0_0 = arith.constant 0 : index
    %c0_1 = arith.constant 0 : index
    %c0_2 = arith.constant 0 : index
    %0 = vector.load %arg3[%c0, %c0_0, %c0_1, %c0_2] : memref<1x18x16x96xbf16, #tpu.memory_space<vmem>>, vector<1x16x16x96xbf16>
    %1 = vector.shape_cast %0 : vector<1x16x16x96xbf16> to vector<16x16x96xbf16>
    %2 = vector.shape_cast %1 : vector<16x16x96xbf16> to vector<256x96xbf16>
    %c0_3 = arith.constant 0 : index
    %c0_4 = arith.constant 0 : index
    %c0_5 = arith.constant 0 : index
    %3 = vector.load %arg4[%c0_3, %c0_4, %c0_5] : memref<3x96x128xbf16, #tpu.memory_space<vmem>>, vector<1x96x128xbf16>
    %4 = vector.shape_cast %3 : vector<1x96x128xbf16> to vector<96x128xbf16>
    %cst = arith.constant dense<0.000000e+00> : vector<256x128xf32>
    %5 = tpu.matmul %2, %4, %cst {dimension_numbers = #tpu.dot_dimension_numbers<[1], [0], [0], [1], [0, 0, 1, 1], [], []>} : vector<256x96xbf16>, vector<96x128xbf16>, vector<256x128xf32> -> vector<256x128xf32>
    %c0_6 = arith.constant 0 : index
    %c1 = arith.constant 1 : index
    %c0_7 = arith.constant 0 : index
    %c0_8 = arith.constant 0 : index
    %6 = vector.load %arg3[%c0_6, %c1, %c0_7, %c0_8] : memref<1x18x16x96xbf16, #tpu.memory_space<vmem>>, vector<1x16x16x96xbf16>
    %7 = vector.shape_cast %6 : vector<1x16x16x96xbf16> to vector<16x16x96xbf16>
    %8 = vector.shape_cast %7 : vector<16x16x96xbf16> to vector<256x96xbf16>
    %c1_9 = arith.constant 1 : index
    %c0_10 = arith.constant 0 : index
    %c0_11 = arith.constant 0 : index
    %9 = vector.load %arg4[%c1_9, %c0_10, %c0_11] : memref<3x96x128xbf16, #tpu.memory_space<vmem>>, vector<1x96x128xbf16>
    %10 = vector.shape_cast %9 : vector<1x96x128xbf16> to vector<96x128xbf16>
    %cst_12 = arith.constant dense<0.000000e+00> : vector<256x128xf32>
    %11 = tpu.matmul %8, %10, %cst_12 {dimension_numbers = #tpu.dot_dimension_numbers<[1], [0], [0], [1], [0, 0, 1, 1], [], []>} : vector<256x96xbf16>, vector<96x128xbf16>, vector<256x128xf32> -> vector<256x128xf32>
    %12 = arith.addf %5, %11 : vector<256x128xf32>
    %c0_13 = arith.constant 0 : index
    %c2 = arith.constant 2 : index
    %c0_14 = arith.constant 0 : index
    %c0_15 = arith.constant 0 : index
    %13 = vector.load %arg3[%c0_13, %c2, %c0_14, %c0_15] : memref<1x18x16x96xbf16, #tpu.memory_space<vmem>>, vector<1x16x16x96xbf16>
    %14 = vector.shape_cast %13 : vector<1x16x16x96xbf16> to vector<16x16x96xbf16>
    %15 = vector.shape_cast %14 : vector<16x16x96xbf16> to vector<256x96xbf16>
    %c2_16 = arith.constant 2 : index
    %c0_17 = arith.constant 0 : index
    %c0_18 = arith.constant 0 : index
    %16 = vector.load %arg4[%c2_16, %c0_17, %c0_18] : memref<3x96x128xbf16, #tpu.memory_space<vmem>>, vector<1x96x128xbf16>
    %17 = vector.shape_cast %16 : vector<1x96x128xbf16> to vector<96x128xbf16>
    %cst_19 = arith.constant dense<0.000000e+00> : vector<256x128xf32>
    %18 = tpu.matmul %15, %17, %cst_19 {dimension_numbers = #tpu.dot_dimension_numbers<[1], [0], [0], [1], [0, 0, 1, 1], [], []>} : vector<256x96xbf16>, vector<96x128xbf16>, vector<256x128xf32> -> vector<256x128xf32>
    %19 = arith.addf %12, %18 : vector<256x128xf32>
    %c0_20 = arith.constant 0 : index
    %c0_21 = arith.constant 0 : index
    %20 = vector.load %arg5[%c0_20, %c0_21] : memref<1x128xf32, #tpu.memory_space<vmem>>, vector<1x128xf32>
    %21 = vector.broadcast %20 : vector<1x128xf32> to vector<256x128xf32>
    %22 = arith.mulf %19, %21 : vector<256x128xf32>
    %c0_22 = arith.constant 0 : index
    %c0_23 = arith.constant 0 : index
    %23 = vector.load %arg6[%c0_22, %c0_23] : memref<1x128xf32, #tpu.memory_space<vmem>>, vector<1x128xf32>
    %24 = vector.broadcast %23 : vector<1x128xf32> to vector<256x128xf32>
    %25 = arith.addf %22, %24 : vector<256x128xf32>
    %cst_24 = arith.constant 0.000000e+00 : f32
    %26 = vector.broadcast %cst_24 : f32 to vector<256x128xf32>
    %27 = arith.maximumf %25, %26 : vector<256x128xf32>
    %28 = vector.shape_cast %27 : vector<256x128xf32> to vector<1x16x16x128xf32>
    %c0_25 = arith.constant 0 : index
    %c0_26 = arith.constant 0 : index
    %c0_27 = arith.constant 0 : index
    %c0_28 = arith.constant 0 : index
    %29 = vector.load %arg7[%c0_25, %c0_26, %c0_27, %c0_28] : memref<1x16x16x128xf32, #tpu.memory_space<vmem>>, vector<1x16x16x128xf32>
    tpu.vector_store %arg7[%c0_25, %c0_26, %c0_27, %c0_28], %28 {strides = array<i32>} : memref<1x16x16x128xf32, #tpu.memory_space<vmem>>, vector<1x16x16x128xf32>,
    return
  }
  func.func @transform_0(%arg0: i32, %arg1: i32, %arg2: i32) -> (i32, i32, i32, i32) {
    %c1_i32 = arith.constant 1 : i32
    %0 = arith.muli %arg0, %c1_i32 : i32
    %1 = arith.addi %0, %arg2 : i32
    %c0_i32 = arith.constant 0 : i32
    %c0_i32_0 = arith.constant 0 : i32
    %c0_i32_1 = arith.constant 0 : i32
    %c0_i32_2 = arith.constant 0 : i32
    return %1, %c0_i32, %c0_i32_0, %c0_i32_1 : i32, i32, i32, i32
  }
  func.func @transform_1(%arg0: i32, %arg1: i32, %arg2: i32) -> (i32, i32, i32) {
    %c0_i32 = arith.constant 0 : i32
    %c0_i32_0 = arith.constant 0 : i32
    %c0_i32_1 = arith.constant 0 : i32
    return %c0_i32, %c0_i32_0, %arg1 : i32, i32, i32
  }
  func.func @transform_2(%arg0: i32, %arg1: i32, %arg2: i32) -> (i32, i32) {
    %c0_i32 = arith.constant 0 : i32
    %c0_i32_0 = arith.constant 0 : i32
    return %c0_i32, %arg1 : i32, i32
  }
  func.func @transform_3(%arg0: i32, %arg1: i32, %arg2: i32) -> (i32, i32) {
    %c0_i32 = arith.constant 0 : i32
    %c0_i32_0 = arith.constant 0 : i32
    return %c0_i32, %arg1 : i32, i32
  }
  func.func @transform_4(%arg0: i32, %arg1: i32, %arg2: i32) -> (i32, i32, i32, i32) {
    %c0_i32 = arith.constant 0 : i32
    %c0_i32_0 = arith.constant 0 : i32
    return %arg0, %arg2, %c0_i32, %arg1 : i32, i32, i32, i32
  }
}

</mosaic_0001>

<llo_original>
// kernel: double_conv.2
$region0: #{double_conv.2}
  #allocation0 [shape = 'u32[]', space=smem, size = 0x4, offset = 0x4, fixed_abs, tag = 'smem constant byte address 0x4 - core index']
  #allocation1 [shape = 'u32[72,128]{1,0:T(1,128)}', space=vmem, size = 0x9000, scoped, tag = 'internal scratch']
  %s0 = inlined_call_operand.vmem [shape: bf16[2,18,16,48], index: 0, kind: input, shape index: {}]
  %s1 = inlined_call_operand.vmem [shape: bf16[3,48,128], index: 1, kind: input, shape index: {}]
  %s2 = inlined_call_operand.vmem [shape: f32[1,128], index: 2, kind: input, shape index: {}]
  %s3 = inlined_call_operand.vmem [shape: f32[1,128], index: 3, kind: input, shape index: {}]
  %s4 = inlined_call_operand.vmem [shape: bf16[2,16,16,128], index: 4, kind: output, shape index: {}]
  %s5 = sld [smem:[#allocation0]]
  $region49: #{double_conv.2} parent=0
    _
  %s7 = ssub.s32 1, %s5
  %s8 = scalar_select 0, %s7, %s5
  loop: start=0, step=1, limit=4
  $region2: #{double_conv.2} parent=0 // loop_pre_header
    _
  $region3: #{double_conv.2} parent=0 // loop_header
    %s10 = sphi 0, %s14
    %p11 = scmp.ge.s32.totalorder %s10, 4
    %s17 = sphi 0, %s36
    %s18 = sphi 0, %s32
    %s19 = sphi 0, %s28
    %s20 = sphi 0, %s17
    %s21 = sphi 0, %s18
    %s22 = sphi 0, %s19
    %s23 = sphi 0, %s20
    %s24 = sphi 0, %s21
    %s25 = sphi 0, %s22
    %s41 = sphi 0, %s43
    %s44 = sphi 0, %s41
    %s45 = sphi 0, %s44
    %s61 = sphi 0, %s45
    %s67 = sphi 0, %s69
    %s70 = sphi 0, %s67
    %s71 = sphi 0, %s70
    %s87 = sphi 0, %s71
    %s93 = sphi 0, %s95
    %s96 = sphi 0, %s93
    %s97 = sphi 0, %s96
    %s113 = sphi 0, %s97
    %s119 = sphi 0, %s121
    %s122 = sphi 0, %s119
    %s123 = sphi 0, %s122
    %s139 = sphi 0, %s123
    %s149 = sphi 0, %s151
    %s152 = sphi 0, %s149
    %s153 = sphi 0, %s152
    %s169 = sphi 0, %s153
  $region4: #{double_conv.2} parent=0 // loop_header_branch
    %13 = sbr.rel (%p11) target = $region8
  $region5: #{double_conv.2} parent=0 // loop_body
    %s15 = ssub.s32 %s10, 1
    %s16 = ssub.s32 %s10, 2
    %s26 = sadd.s32 1, %s19
    %p27 = scmp.ge.s32.totalorder %s26, 1
    %s28 = scalar_select %p27, 0, %s26
    %s29 = sadd.s32 1, %s18
    %s30 = scalar_select %p27, %s29, %s18
    %p31 = scmp.ge.s32.totalorder %s30, 1
    %s32 = scalar_select %p31, 0, %s30
    %s33 = sadd.s32 1, %s17
    %s34 = scalar_select %p31, %s33, %s17
    %p35 = scmp.ge.s32.totalorder %s34, 2
    %s36 = scalar_select %p35, 0, %s34
    %s37 = sadd.s32 %s17, %s19
    %s38 = sadd.s32 %s36, %s28
    %s39 = ssub.s32 %s37, %s38
    %p40 = scmp.eq.s32.totalorder %s39, 0
    %s42 = sadd.s32 %s41, 1
    %s43 = scalar_select %p40, %s41, %s42
    %p46 = pneg %p40
    %p47 = scmp.eq.s32.totalorder %s10, 1
    %p48 = por %p46, %p47
    %p49 = scmp.ne.s32.totalorder %s41, %s44
    %p50 = scmp.eq.s32.totalorder %s10, 0
    %p51 = por %p49, %p50
    %p52 = scmp.ne.s32.totalorder %s41, %s44
    %p53 = scmp.eq.s32.totalorder %s15, 1
    %p54 = por %p52, %p53
    %p55 = scmp.ne.s32.totalorder %s44, %s45
    %p56 = scmp.eq.s32.totalorder %s15, 0
    %p57 = por %p55, %p56
    %p58 = scmp.ne.s32.totalorder %s44, %s45
    %p59 = scmp.eq.s32.totalorder %s16, 1
    %p60 = por %p58, %p59
    %p62 = scmp.ne.s32.totalorder %s45, %s61
    %p63 = scmp.eq.s32.totalorder %s16, 0
    %p64 = por %p62, %p63
    %s65 = ssub.s32 %s18, %s32
    %p66 = scmp.eq.s32.totalorder %s65, 0
    %s68 = sadd.s32 %s67, 1
    %s69 = scalar_select %p66, %s67, %s68
    %p72 = pneg %p66
    %p73 = scmp.eq.s32.totalorder %s10, 1
    %p74 = por %p72, %p73
    %p75 = scmp.ne.s32.totalorder %s67, %s70
    %p76 = scmp.eq.s32.totalorder %s10, 0
    %p77 = por %p75, %p76
    %p78 = scmp.ne.s32.totalorder %s67, %s70
    %p79 = scmp.eq.s32.totalorder %s15, 1
    %p80 = por %p78, %p79
    %p81 = scmp.ne.s32.totalorder %s70, %s71
    %p82 = scmp.eq.s32.totalorder %s15, 0
    %p83 = por %p81, %p82
    %p84 = scmp.ne.s32.totalorder %s70, %s71
    %p85 = scmp.eq.s32.totalorder %s16, 1
    %p86 = por %p84, %p85
    %p88 = scmp.ne.s32.totalorder %s71, %s87
    %p89 = scmp.eq.s32.totalorder %s16, 0
    %p90 = por %p88, %p89
    %s91 = ssub.s32 %s18, %s32
    %p92 = scmp.eq.s32.totalorder %s91, 0
    %s94 = sadd.s32 %s93, 1
    %s95 = scalar_select %p92, %s93, %s94
    %p98 = pneg %p92
    %p99 = scmp.eq.s32.totalorder %s10, 1
    %p100 = por %p98, %p99
    %p101 = scmp.ne.s32.totalorder %s93, %s96
    %p102 = scmp.eq.s32.totalorder %s10, 0
    %p103 = por %p101, %p102
    %p104 = scmp.ne.s32.totalorder %s93, %s96
    %p105 = scmp.eq.s32.totalorder %s15, 1
    %p106 = por %p104, %p105
    %p107 = scmp.ne.s32.totalorder %s96, %s97
    %p108 = scmp.eq.s32.totalorder %s15, 0
    %p109 = por %p107, %p108
    %p110 = scmp.ne.s32.totalorder %s96, %s97
    %p111 = scmp.eq.s32.totalorder %s16, 1
    %p112 = por %p110, %p111
    %p114 = scmp.ne.s32.totalorder %s97, %s113
    %p115 = scmp.eq.s32.totalorder %s16, 0
    %p116 = por %p114, %p115
    %s117 = ssub.s32 %s18, %s32
    %p118 = scmp.eq.s32.totalorder %s117, 0
    %s120 = sadd.s32 %s119, 1
    %s121 = scalar_select %p118, %s119, %s120
    %p124 = pneg %p118
    %p125 = scmp.eq.s32.totalorder %s10, 1
    %p126 = por %p124, %p125
    %p127 = scmp.ne.s32.totalorder %s119, %s122
    %p128 = scmp.eq.s32.totalorder %s10, 0
    %p129 = por %p127, %p128
    %p130 = scmp.ne.s32.totalorder %s119, %s122
    %p131 = scmp.eq.s32.totalorder %s15, 1
    %p132 = por %p130, %p131
    %p133 = scmp.ne.s32.totalorder %s122, %s123
    %p134 = scmp.eq.s32.totalorder %s15, 0
    %p135 = por %p133, %p134
    %p136 = scmp.ne.s32.totalorder %s122, %s123
    %p137 = scmp.eq.s32.totalorder %s16, 1
    %p138 = por %p136, %p137
    %p140 = scmp.ne.s32.totalorder %s123, %s139
    %p141 = scmp.eq.s32.totalorder %s16, 0
    %p142 = por %p140, %p141
    %s143 = ssub.s32 %s17, %s36
    %s144 = ssub.s32 %s19, %s28
    %s145 = sor.u32 %s143, %s144
    %s146 = ssub.s32 %s18, %s32
    %s147 = sor.u32 %s145, %s146
    %p148 = scmp.eq.s32.totalorder %s147, 0
    %s150 = sadd.s32 %s149, 1
    %s151 = scalar_select %p148, %s149, %s150
    %p154 = pneg %p148
    %p155 = scmp.eq.s32.totalorder %s10, 1
    %p156 = por %p154, %p155
    %p157 = scmp.ne.s32.totalorder %s149, %s152
    %p158 = scmp.eq.s32.totalorder %s10, 0
    %p159 = por %p157, %p158
    %p160 = scmp.ne.s32.totalorder %s149, %s152
    %p161 = scmp.eq.s32.totalorder %s15, 1
    %p162 = por %p160, %p161
    %p163 = scmp.ne.s32.totalorder %s152, %s153
    %p164 = scmp.eq.s32.totalorder %s15, 0
    %p165 = por %p163, %p164
    %p166 = scmp.ne.s32.totalorder %s152, %s153
    %p167 = scmp.eq.s32.totalorder %s16, 1
    %p168 = por %p166, %p167
    %p170 = scmp.ne.s32.totalorder %s153, %s169
    %p171 = scmp.eq.s32.totalorder %s16, 0
    %p172 = por %p170, %p171
    %p173 = scmp.le.s32.totalorder 1, %s10
    %p174 = scmp.lt.s32.totalorder %s10, 3
    %p175 = pnand %p173, %p174
    %p176 = pneg %p175
    // Predicated region
    $region9: #{double_conv.2} parent=5 // pred_check
      _
    $region10: #{double_conv.2} parent=5 // pred_check_branch
      %178 = sbr.rel (%p175) target = $region12
    $region11: #{double_conv.2} parent=5 // pred_region
      %s179 = ssub.s32 %s10, 1
      // Predicated region
      $region13: #{double_conv.2} parent=11 // pred_check
        %p180 = pneg %p83
      $region14: #{double_conv.2} parent=11 // pred_check_branch
        %182 = sbr.rel (%p180) target = $region16
      $region15: #{double_conv.2} parent=11 // pred_region
        %p183 = scmp.lt.s32.totalorder %s21, 0
        %s184 = scalar_select %p183, %s21, 0
        %s185 = smul.addr %s184, 4
        %s186 = scalar_lea.vmem %s1, %s185
      $region16: #{double_conv.2} parent=11 // pred_fallthru
        _
      // Predicated region
      $region17: #{double_conv.2} parent=11 // pred_check
        %p187 = pneg %p109
      $region18: #{double_conv.2} parent=11 // pred_check_branch
        %189 = sbr.rel (%p187) target = $region20
      $region19: #{double_conv.2} parent=11 // pred_region
        %p190 = scmp.lt.s32.totalorder %s21, 0
        %s191 = scalar_select %p190, %s21, 0
        %s192 = scalar_lea.vmem %s2, %s191
      $region20: #{double_conv.2} parent=11 // pred_fallthru
        _
      // Predicated region
      $region21: #{double_conv.2} parent=11 // pred_check
        %p193 = pneg %p135
      $region22: #{double_conv.2} parent=11 // pred_check_branch
        %195 = sbr.rel (%p193) target = $region24
      $region23: #{double_conv.2} parent=11 // pred_region
        %p196 = scmp.lt.s32.totalorder %s21, 0
        %s197 = scalar_select %p196, %s21, 0
        %s198 = scalar_lea.vmem %s3, %s197
      $region24: #{double_conv.2} parent=11 // pred_fallthru
        _
    $region12: #{double_conv.2} parent=5 // pred_fallthru
      _
    %p199 = scmp.lt.s32.totalorder %s10, 2
    // Predicated region
    $region25: #{double_conv.2} parent=5 // pred_check
      %p200 = pneg %p199
    $region26: #{double_conv.2} parent=5 // pred_check_branch
      %202 = sbr.rel (%p200) target = $region28
    $region27: #{double_conv.2} parent=5 // pred_region
      // Predicated region
      $region29: #{double_conv.2} parent=27 // pred_check
        %p203 = pneg %p51
      $region30: #{double_conv.2} parent=27 // pred_check_branch
        %205 = sbr.rel (%p203) target = $region32
      $region31: #{double_conv.2} parent=27 // pred_region
        %s206 = sadd.s32 %s17, %s19
        %p207 = scmp.lt.s32.totalorder %s206, 1
        %s208 = scalar_select %p207, %s206, 1
        %s209 = smul.addr %s208, 36
        %s210 = smul.addr %s209, 4
        %s211 = scalar_lea.vmem %s0, %s210
        %s212 = sadd.s32 %s17, %s19
      $region32: #{double_conv.2} parent=27 // pred_fallthru
        _
    $region28: #{double_conv.2} parent=5 // pred_fallthru
      _
    %p213 = scmp.le.s32.totalorder 1, %s10
    %p214 = scmp.lt.s32.totalorder %s10, 3
    %p215 = pnand %p213, %p214
    %p216 = pneg %p215
    // Predicated region
    $region33: #{double_conv.2} parent=5 // pred_check
      _
    $region34: #{double_conv.2} parent=5 // pred_check_branch
      %218 = sbr.rel (%p215) target = $region36
    $region35: #{double_conv.2} parent=5 // pred_region
      %s219 = ssub.s32 %s10, 1
      %s220 = sadd.s32 %s20, %s22
      %p221 = scmp.lt.s32.totalorder %s220, 1
      %s222 = scalar_select %p221, %s220, 1
      %s223 = smul.addr %s222, 36
      %s224 = smul.addr %s223, 4
      %s225 = scalar_lea.vmem %s0, %s224
      %p226 = pneg %p57
      %p227 = pneg %p54
      %p228 = scmp.lt.s32.totalorder %s21, 0
      %s229 = scalar_select %p228, %s21, 0
      %s230 = smul.addr %s229, 4
      %s231 = scalar_lea.vmem %s1, %s230
      %p232 = pneg %p83
      %p233 = pneg %p80
      %p234 = scmp.lt.s32.totalorder %s21, 0
      %s235 = scalar_select %p234, %s21, 0
      %s236 = scalar_lea.vmem %s2, %s235
      %p237 = pneg %p109
      %p238 = pneg %p106
      %p239 = scmp.lt.s32.totalorder %s21, 0
      %s240 = scalar_select %p239, %s21, 0
      %s241 = scalar_lea.vmem %s3, %s240
      %p242 = pneg %p135
      %p243 = pneg %p132
      %p244 = pneg %p165
      %p245 = pneg %p162
      %s246 = smul.u32 16, %s22
      %p247 = scmp.lt.s32.totalorder %s20, 1
      %s248 = scalar_select %p247, %s20, 1
      %p249 = scmp.lt.s32.totalorder %s246, 15
      %s250 = scalar_select %p249, %s246, 15
      %p251 = scmp.lt.s32.totalorder %s21, 0
      %s252 = scalar_select %p251, %s21, 0
      %s253 = smul.addr %s250, 2
      %s254 = sadd.s32 %s252, %s253
      %s255 = smul.addr %s248, 32
      %s256 = sadd.s32 %s254, %s255
      %s257 = smul.addr %s256, 4
      %s258 = scalar_lea.vmem %s4, %s257
      %s259 = sadd.s32 %s20, %s22
      %p260 = scmp.lt.s32.totalorder %s259, 1
      %s261 = scalar_select %p260, %s259, 1
      %s262 = smul.addr %s261, 36
      %s263 = smul.addr %s262, 4
      %s264 = scalar_lea.vmem %s0, %s263
      %s265 = sadd.s32 %s20, %s22
      %p266 = scmp.lt.s32.totalorder %s21, 0
      %s267 = scalar_select %p266, %s21, 0
      %s268 = smul.addr %s267, 4
      %s269 = scalar_lea.vmem %s1, %s268
      %p270 = scmp.lt.s32.totalorder %s21, 0
      %s271 = scalar_select %p270, %s21, 0
      %s272 = scalar_lea.vmem %s2, %s271
      %p273 = scmp.lt.s32.totalorder %s21, 0
      %s274 = scalar_select %p273, %s21, 0
      %s275 = scalar_lea.vmem %s3, %s274
      %s276 = smul.u32 16, %s22
      %p277 = scmp.lt.s32.totalorder %s20, 1
      %s278 = scalar_select %p277, %s20, 1
      %p279 = scmp.lt.s32.totalorder %s276, 15
      %s280 = scalar_select %p279, %s276, 15
      %p281 = scmp.lt.s32.totalorder %s21, 0
      %s282 = scalar_select %p281, %s21, 0
      %s283 = smul.addr %s280, 2
      %s284 = sadd.s32 %s282, %s283
      %s285 = smul.addr %s278, 32
      %s286 = sadd.s32 %s284, %s285
      %s287 = smul.addr %s286, 4
      %s288 = scalar_lea.vmem %s4, %s287
      %s289 = smul.u32 16, %s22
      %v291 = vld [vmem:[%s264] sm:$0xf]
      %v292 = vld [vmem:[%s264 + $0x4] sm:$0xf]
      %v293 = vld [vmem:[%s264 + $0x8] sm:$0xf]
      %v294 = vld [vmem:[%s264 + $0xc] sm:$0xf]
      %v295 = vld [vmem:[%s264 + $0x10] sm:$0xf]
      %v296 = vld [vmem:[%s264 + $0x14] sm:$0xf]
      %v297 = vld [vmem:[%s264 + $0x18] sm:$0xf]
      %v298 = vld [vmem:[%s264 + $0x1c] sm:$0xf]
      %v299 = vld [vmem:[%s264 + $0x20] sm:$0xf]
      %v300 = vld [vmem:[%s264 + $0x24] sm:$0xf]
      %v301 = vld [vmem:[%s264 + $0x28] sm:$0xf]
      %v302 = vld [vmem:[%s264 + $0x2c] sm:$0xf]
      %v303 = vld [vmem:[%s264 + $0x30] sm:$0xf]
      %v304 = vld [vmem:[%s264 + $0x34] sm:$0xf]
      %v305 = vld [vmem:[%s264 + $0x38] sm:$0xf]
      %v306 = vld [vmem:[%s264 + $0x3c] sm:$0xf]
      %v307 = vld [vmem:[%s264 + $0x40] sm:$0xf]
      %v308 = vld [vmem:[%s264 + $0x44] sm:$0xf]
      %v309 = vld [vmem:[%s264 + $0x48] sm:$0xf]
      %v310 = vld [vmem:[%s264 + $0x4c] sm:$0xf]
      %v311 = vld [vmem:[%s264 + $0x50] sm:$0xf]
      %v312 = vld [vmem:[%s264 + $0x54] sm:$0xf]
      %v313 = vld [vmem:[%s264 + $0x58] sm:$0xf]
      %v314 = vld [vmem:[%s264 + $0x5c] sm:$0xf]
      %v315 = vld [vmem:[%s264 + $0x60] sm:$0xf]
      %v316 = vld [vmem:[%s264 + $0x64] sm:$0xf]
      %v317 = vld [vmem:[%s264 + $0x68] sm:$0xf]
      %v318 = vld [vmem:[%s264 + $0x6c] sm:$0xf]
      %v319 = vld [vmem:[%s264 + $0x70] sm:$0xf]
      %v320 = vld [vmem:[%s264 + $0x74] sm:$0xf]
      %v321 = vld [vmem:[%s264 + $0x78] sm:$0xf]
      %v322 = vld [vmem:[%s264 + $0x7c] sm:$0xf]
      %v323 = vld [vmem:[%s269] sm:$0xf]
      %v324 = vld [vmem:[%s269 + $0x4] sm:$0xf]
      %v325 = vld [vmem:[%s269 + $0x8] sm:$0xf]
      %v326 = vld [vmem:[%s269 + $0xc] sm:$0xf]
      %v327 = vld [vmem:[%s269 + $0x10] sm:$0xf]
      %v328 = vld [vmem:[%s269 + $0x14] sm:$0xf]
      %s329 = scalar_lea.vmem %s264, 8
      %v330 = vld [vmem:[%s329] sm:$0xf]
      %v331 = vld [vmem:[%s329 + $0x4] sm:$0xf]
      %v332 = vld [vmem:[%s329 + $0x8] sm:$0xf]
      %v333 = vld [vmem:[%s329 + $0xc] sm:$0xf]
      %v334 = vld [vmem:[%s329 + $0x10] sm:$0xf]
      %v335 = vld [vmem:[%s329 + $0x14] sm:$0xf]
      %v336 = vld [vmem:[%s329 + $0x18] sm:$0xf]
      %v337 = vld [vmem:[%s329 + $0x1c] sm:$0xf]
      %v338 = vld [vmem:[%s329 + $0x20] sm:$0xf]
      %v339 = vld [vmem:[%s329 + $0x24] sm:$0xf]
      %v340 = vld [vmem:[%s329 + $0x28] sm:$0xf]
      %v341 = vld [vmem:[%s329 + $0x2c] sm:$0xf]
      %v342 = vld [vmem:[%s329 + $0x30] sm:$0xf]
      %v343 = vld [vmem:[%s329 + $0x34] sm:$0xf]
      %v344 = vld [vmem:[%s329 + $0x38] sm:$0xf]
      %v345 = vld [vmem:[%s329 + $0x3c] sm:$0xf]
      %v346 = vld [vmem:[%s329 + $0x40] sm:$0xf]
      %v347 = vld [vmem:[%s329 + $0x44] sm:$0xf]
      %v348 = vld [vmem:[%s329 + $0x48] sm:$0xf]
      %v349 = vld [vmem:[%s329 + $0x4c] sm:$0xf]
      %v350 = vld [vmem:[%s329 + $0x50] sm:$0xf]
      %v351 = vld [vmem:[%s329 + $0x54] sm:$0xf]
      %v352 = vld [vmem:[%s329 + $0x58] sm:$0xf]
      %v353 = vld [vmem:[%s329 + $0x5c] sm:$0xf]
      %v354 = vld [vmem:[%s329 + $0x60] sm:$0xf]
      %v355 = vld [vmem:[%s329 + $0x64] sm:$0xf]
      %v356 = vld [vmem:[%s329 + $0x68] sm:$0xf]
      %v357 = vld [vmem:[%s329 + $0x6c] sm:$0xf]
      %v358 = vld [vmem:[%s329 + $0x70] sm:$0xf]
      %v359 = vld [vmem:[%s329 + $0x74] sm:$0xf]
      %v360 = vld [vmem:[%s329 + $0x78] sm:$0xf]
      %v361 = vld [vmem:[%s329 + $0x7c] sm:$0xf]
      %s362 = scalar_lea.vmem %s269, 24
      %v363 = vld [vmem:[%s362] sm:$0xf]
      %v364 = vld [vmem:[%s362 + $0x4] sm:$0xf]
      %v365 = vld [vmem:[%s362 + $0x8] sm:$0xf]
      %v366 = vld [vmem:[%s362 + $0xc] sm:$0xf]
      %v367 = vld [vmem:[%s362 + $0x10] sm:$0xf]
      %v368 = vld [vmem:[%s362 + $0x14] sm:$0xf]
      %v401 = vunpack.c.l.b16 %v330
      %v402 = vunpack.c.l.b16 %v331
      %v403 = vunpack.c.l.b16 %v332
      %v404 = vunpack.c.l.b16 %v333
      %v405 = vunpack.c.l.b16 %v334
      %v406 = vunpack.c.l.b16 %v335
      %v407 = vunpack.c.l.b16 %v336
      %v408 = vunpack.c.l.b16 %v337
      %v409 = vunpack.c.l.b16 %v338
      %v410 = vunpack.c.l.b16 %v339
      %v411 = vunpack.c.l.b16 %v340
      %v412 = vunpack.c.l.b16 %v341
      %v413 = vunpack.c.l.b16 %v342
      %v414 = vunpack.c.l.b16 %v343
      %v415 = vunpack.c.l.b16 %v344
      %v416 = vunpack.c.l.b16 %v345
      %v417 = vunpack.c.l.b16 %v346
      %v418 = vunpack.c.l.b16 %v347
      %v419 = vunpack.c.l.b16 %v348
      %v420 = vunpack.c.l.b16 %v349
      %v421 = vunpack.c.l.b16 %v350
      %v422 = vunpack.c.l.b16 %v351
      %v423 = vunpack.c.l.b16 %v352
      %v424 = vunpack.c.l.b16 %v353
      %v425 = vunpack.c.l.b16 %v354
      %v426 = vunpack.c.l.b16 %v355
      %v427 = vunpack.c.l.b16 %v356
      %v428 = vunpack.c.l.b16 %v357
      %v429 = vunpack.c.l.b16 %v358
      %v430 = vunpack.c.l.b16 %v359
      %v431 = vunpack.c.l.b16 %v360
      %v432 = vunpack.c.l.b16 %v361
      %v433 = vpack.c.b16 %v402, %v401
      %v434 = vpack.c.b16 %v404, %v403
      %v435 = vpack.c.b16 %v406, %v405
      %v436 = vpack.c.b16 %v408, %v407
      %v437 = vpack.c.b16 %v410, %v409
      %v438 = vpack.c.b16 %v412, %v411
      %v439 = vpack.c.b16 %v414, %v413
      %v440 = vpack.c.b16 %v416, %v415
      %v441 = vpack.c.b16 %v418, %v417
      %v442 = vpack.c.b16 %v420, %v419
      %v443 = vpack.c.b16 %v422, %v421
      %v444 = vpack.c.b16 %v424, %v423
      %v445 = vpack.c.b16 %v426, %v425
      %v446 = vpack.c.b16 %v428, %v427
      %v447 = vpack.c.b16 %v430, %v429
      %v448 = vpack.c.b16 %v432, %v431
      %v455 = vunpack.c.l.b16 %v363
      %v456 = vunpack.c.l.b16 %v364
      %v457 = vunpack.c.l.b16 %v365
      %v458 = vunpack.c.l.b16 %v366
      %v459 = vunpack.c.l.b16 %v367
      %v460 = vunpack.c.l.b16 %v368
      %v461 = vpack.c.b16 %v456, %v455
      %v462 = vpack.c.b16 %v458, %v457
      %v463 = vpack.c.b16 %v460, %v459
      %vm467 = vcmask 392192
      %v469 = vsel %vm467, %v433, 0
      %v472 = vsel %vm467, %v434, 0
      %v475 = vsel %vm467, %v435, 0
      %v478 = vsel %vm467, %v436, 0
      %v481 = vsel %vm467, %v437, 0
      %v484 = vsel %vm467, %v438, 0
      %v487 = vsel %vm467, %v439, 0
      %v490 = vsel %vm467, %v440, 0
      %v493 = vsel %vm467, %v441, 0
      %v496 = vsel %vm467, %v442, 0
      %v499 = vsel %vm467, %v443, 0
      %v502 = vsel %vm467, %v444, 0
      %v505 = vsel %vm467, %v445, 0
      %v508 = vsel %vm467, %v446, 0
      %v511 = vsel %vm467, %v447, 0
      %v514 = vsel %vm467, %v448, 0
      %516 = vmatpush.bf16.msra.mxu0 0
      %517 = vmatpush.bf16.msra.mxu0 0
      %518 = vmatpush.bf16.msra.mxu0 0
      %519 = vmatpush.bf16.msra.mxu0 0
      %520 = vmatpush.bf16.msra.mxu0 0
      %521 = vmatpush.bf16.msra.mxu0 %v463
      %522 = vmatpush.bf16.msra.mxu0 %v462
      %523 = vmatpush.bf16.msra.mxu0 %v461
      %524 = vmatmul.bf16.gmra.mxu0 %v469
      %v525 = vpop.f32.mrf.mxu0
      %v526 = vadd.f32 0.0, %v525
      %v527 = vpop.f32.mrf.mxu0
      %v528 = vadd.f32 0.0, %v527
      %529 = vmatmul.bf16.gmra.mxu0 %v472
      %v530 = vpop.f32.mrf.mxu0
      %v531 = vadd.f32 0.0, %v530
      %v532 = vpop.f32.mrf.mxu0
      %v533 = vadd.f32 0.0, %v532
      %534 = vmatmul.bf16.gmra.mxu0 %v475
      %v535 = vpop.f32.mrf.mxu0
      %v536 = vadd.f32 0.0, %v535
      %v537 = vpop.f32.mrf.mxu0
      %v538 = vadd.f32 0.0, %v537
      %539 = vmatmul.bf16.gmra.mxu0 %v478
      %v540 = vpop.f32.mrf.mxu0
      %v541 = vadd.f32 0.0, %v540
      %v542 = vpop.f32.mrf.mxu0
      %v543 = vadd.f32 0.0, %v542
      %544 = vmatmul.bf16.gmra.mxu0 %v481
      %v545 = vpop.f32.mrf.mxu0
      %v546 = vadd.f32 0.0, %v545
      %v547 = vpop.f32.mrf.mxu0
      %v548 = vadd.f32 0.0, %v547
      %549 = vmatmul.bf16.gmra.mxu0 %v484
      %v550 = vpop.f32.mrf.mxu0
      %v551 = vadd.f32 0.0, %v550
      %v552 = vpop.f32.mrf.mxu0
      %v553 = vadd.f32 0.0, %v552
      %554 = vmatmul.bf16.gmra.mxu0 %v487
      %v555 = vpop.f32.mrf.mxu0
      %v556 = vadd.f32 0.0, %v555
      %v557 = vpop.f32.mrf.mxu0
      %v558 = vadd.f32 0.0, %v557
      %559 = vmatmul.bf16.gmra.mxu0 %v490
      %v560 = vpop.f32.mrf.mxu0
      %v561 = vadd.f32 0.0, %v560
      %v562 = vpop.f32.mrf.mxu0
      %v563 = vadd.f32 0.0, %v562
      %564 = vmatmul.bf16.gmra.mxu0 %v493
      %v565 = vpop.f32.mrf.mxu0
      %v566 = vadd.f32 0.0, %v565
      %v567 = vpop.f32.mrf.mxu0
      %v568 = vadd.f32 0.0, %v567
      %569 = vmatmul.bf16.gmra.mxu0 %v496
      %v570 = vpop.f32.mrf.mxu0
      %v571 = vadd.f32 0.0, %v570
      %v572 = vpop.f32.mrf.mxu0
      %v573 = vadd.f32 0.0, %v572
      %574 = vmatmul.bf16.gmra.mxu0 %v499
      %v575 = vpop.f32.mrf.mxu0
      %v576 = vadd.f32 0.0, %v575
      %v577 = vpop.f32.mrf.mxu0
      %v578 = vadd.f32 0.0, %v577
      %579 = vmatmul.bf16.gmra.mxu0 %v502
      %v580 = vpop.f32.mrf.mxu0
      %v581 = vadd.f32 0.0, %v580
      %v582 = vpop.f32.mrf.mxu0
      %v583 = vadd.f32 0.0, %v582
      %584 = vmatmul.bf16.gmra.mxu0 %v505
      %v585 = vpop.f32.mrf.mxu0
      %v586 = vadd.f32 0.0, %v585
      %v587 = vpop.f32.mrf.mxu0
      %v588 = vadd.f32 0.0, %v587
      %589 = vmatmul.bf16.gmra.mxu0 %v508
      %v590 = vpop.f32.mrf.mxu0
      %v591 = vadd.f32 0.0, %v590
      %v592 = vpop.f32.mrf.mxu0
      %v593 = vadd.f32 0.0, %v592
      %594 = vmatmul.bf16.gmra.mxu0 %v511
      %v595 = vpop.f32.mrf.mxu0
      %v596 = vadd.f32 0.0, %v595
      %v597 = vpop.f32.mrf.mxu0
      %v598 = vadd.f32 0.0, %v597
      %599 = vmatmul.bf16.gmra.mxu0 %v514
      %v600 = vpop.f32.mrf.mxu0
      %v601 = vadd.f32 0.0, %v600
      %v602 = vpop.f32.mrf.mxu0
      %v603 = vadd.f32 0.0, %v602
      %604 = vdwg.mxu0
      %v637 = vunpack.c.l.b16 %v291
      %v638 = vunpack.c.l.b16 %v292
      %v639 = vunpack.c.l.b16 %v293
      %v640 = vunpack.c.l.b16 %v294
      %v641 = vunpack.c.l.b16 %v295
      %v642 = vunpack.c.l.b16 %v296
      %v643 = vunpack.c.l.b16 %v297
      %v644 = vunpack.c.l.b16 %v298
      %v645 = vunpack.c.l.b16 %v299
      %v646 = vunpack.c.l.b16 %v300
      %v647 = vunpack.c.l.b16 %v301
      %v648 = vunpack.c.l.b16 %v302
      %v649 = vunpack.c.l.b16 %v303
      %v650 = vunpack.c.l.b16 %v304
      %v651 = vunpack.c.l.b16 %v305
      %v652 = vunpack.c.l.b16 %v306
      %v653 = vunpack.c.l.b16 %v307
      %v654 = vunpack.c.l.b16 %v308
      %v655 = vunpack.c.l.b16 %v309
      %v656 = vunpack.c.l.b16 %v310
      %v657 = vunpack.c.l.b16 %v311
      %v658 = vunpack.c.l.b16 %v312
      %v659 = vunpack.c.l.b16 %v313
      %v660 = vunpack.c.l.b16 %v314
      %v661 = vunpack.c.l.b16 %v315
      %v662 = vunpack.c.l.b16 %v316
      %v663 = vunpack.c.l.b16 %v317
      %v664 = vunpack.c.l.b16 %v318
      %v665 = vunpack.c.l.b16 %v319
      %v666 = vunpack.c.l.b16 %v320
      %v667 = vunpack.c.l.b16 %v321
      %v668 = vunpack.c.l.b16 %v322
      %v669 = vpack.c.b16 %v638, %v637
      %v670 = vpack.c.b16 %v640, %v639
      %v671 = vpack.c.b16 %v642, %v641
      %v672 = vpack.c.b16 %v644, %v643
      %v673 = vpack.c.b16 %v646, %v645
      %v674 = vpack.c.b16 %v648, %v647
      %v675 = vpack.c.b16 %v650, %v649
      %v676 = vpack.c.b16 %v652, %v651
      %v677 = vpack.c.b16 %v654, %v653
      %v678 = vpack.c.b16 %v656, %v655
      %v679 = vpack.c.b16 %v658, %v657
      %v680 = vpack.c.b16 %v660, %v659
      %v681 = vpack.c.b16 %v662, %v661
      %v682 = vpack.c.b16 %v664, %v663
      %v683 = vpack.c.b16 %v666, %v665
      %v684 = vpack.c.b16 %v668, %v667
      %v691 = vunpack.c.l.b16 %v323
      %v692 = vunpack.c.l.b16 %v324
      %v693 = vunpack.c.l.b16 %v325
      %v694 = vunpack.c.l.b16 %v326
      %v695 = vunpack.c.l.b16 %v327
      %v696 = vunpack.c.l.b16 %v328
      %v697 = vpack.c.b16 %v692, %v691
      %v698 = vpack.c.b16 %v694, %v693
      %v699 = vpack.c.b16 %v696, %v695
      %v704 = vsel %vm467, %v669, 0
      %v707 = vsel %vm467, %v670, 0
      %v710 = vsel %vm467, %v671, 0
      %v713 = vsel %vm467, %v672, 0
      %v716 = vsel %vm467, %v673, 0
      %v719 = vsel %vm467, %v674, 0
      %v722 = vsel %vm467, %v675, 0
      %v725 = vsel %vm467, %v676, 0
      %v728 = vsel %vm467, %v677, 0
      %v731 = vsel %vm467, %v678, 0
      %v734 = vsel %vm467, %v679, 0
      %v737 = vsel %vm467, %v680, 0
      %v740 = vsel %vm467, %v681, 0
      %v743 = vsel %vm467, %v682, 0
      %v746 = vsel %vm467, %v683, 0
      %v749 = vsel %vm467, %v684, 0
      %751 = vmatpush.bf16.msra.mxu0 0
      %752 = vmatpush.bf16.msra.mxu0 0
      %753 = vmatpush.bf16.msra.mxu0 0
      %754 = vmatpush.bf16.msra.mxu0 0
      %755 = vmatpush.bf16.msra.mxu0 0
      %756 = vmatpush.bf16.msra.mxu0 %v699
      %757 = vmatpush.bf16.msra.mxu0 %v698
      %758 = vmatpush.bf16.msra.mxu0 %v697
      %759 = vmatmul.bf16.gmra.mxu0 %v704
      %v760 = vpop.f32.mrf.mxu0
      %v761 = vadd.f32 %v526, %v760
      %v762 = vpop.f32.mrf.mxu0
      %v763 = vadd.f32 %v528, %v762
      %764 = vmatmul.bf16.gmra.mxu0 %v707
      %v765 = vpop.f32.mrf.mxu0
      %v766 = vadd.f32 %v531, %v765
      %v767 = vpop.f32.mrf.mxu0
      %v768 = vadd.f32 %v533, %v767
      %769 = vmatmul.bf16.gmra.mxu0 %v710
      %v770 = vpop.f32.mrf.mxu0
      %v771 = vadd.f32 %v536, %v770
      %v772 = vpop.f32.mrf.mxu0
      %v773 = vadd.f32 %v538, %v772
      %774 = vmatmul.bf16.gmra.mxu0 %v713
      %v775 = vpop.f32.mrf.mxu0
      %v776 = vadd.f32 %v541, %v775
      %v777 = vpop.f32.mrf.mxu0
      %v778 = vadd.f32 %v543, %v777
      %779 = vmatmul.bf16.gmra.mxu0 %v716
      %v780 = vpop.f32.mrf.mxu0
      %v781 = vadd.f32 %v546, %v780
      %v782 = vpop.f32.mrf.mxu0
      %v783 = vadd.f32 %v548, %v782
      %784 = vmatmul.bf16.gmra.mxu0 %v719
      %v785 = vpop.f32.mrf.mxu0
      %v786 = vadd.f32 %v551, %v785
      %v787 = vpop.f32.mrf.mxu0
      %v788 = vadd.f32 %v553, %v787
      %789 = vmatmul.bf16.gmra.mxu0 %v722
      %v790 = vpop.f32.mrf.mxu0
      %v791 = vadd.f32 %v556, %v790
      %v792 = vpop.f32.mrf.mxu0
      %v793 = vadd.f32 %v558, %v792
      %794 = vmatmul.bf16.gmra.mxu0 %v725
      %v795 = vpop.f32.mrf.mxu0
      %v796 = vadd.f32 %v561, %v795
      %v797 = vpop.f32.mrf.mxu0
      %v798 = vadd.f32 %v563, %v797
      %799 = vmatmul.bf16.gmra.mxu0 %v728
      %v800 = vpop.f32.mrf.mxu0
      %v801 = vadd.f32 %v566, %v800
      %v802 = vpop.f32.mrf.mxu0
      %v803 = vadd.f32 %v568, %v802
      %804 = vmatmul.bf16.gmra.mxu0 %v731
      %v805 = vpop.f32.mrf.mxu0
      %v806 = vadd.f32 %v571, %v805
      %v807 = vpop.f32.mrf.mxu0
      %v808 = vadd.f32 %v573, %v807
      %809 = vmatmul.bf16.gmra.mxu0 %v734
      %v810 = vpop.f32.mrf.mxu0
      %v811 = vadd.f32 %v576, %v810
      %v812 = vpop.f32.mrf.mxu0
      %v813 = vadd.f32 %v578, %v812
      %814 = vmatmul.bf16.gmra.mxu0 %v737
      %v815 = vpop.f32.mrf.mxu0
      %v816 = vadd.f32 %v581, %v815
      %v817 = vpop.f32.mrf.mxu0
      %v818 = vadd.f32 %v583, %v817
      %819 = vmatmul.bf16.gmra.mxu0 %v740
      %v820 = vpop.f32.mrf.mxu0
      %v821 = vadd.f32 %v586, %v820
      %v822 = vpop.f32.mrf.mxu0
      %v823 = vadd.f32 %v588, %v822
      %824 = vmatmul.bf16.gmra.mxu0 %v743
      %v825 = vpop.f32.mrf.mxu0
      %v826 = vadd.f32 %v591, %v825
      %v827 = vpop.f32.mrf.mxu0
      %v828 = vadd.f32 %v593, %v827
      %829 = vmatmul.bf16.gmra.mxu0 %v746
      %v830 = vpop.f32.mrf.mxu0
      %v831 = vadd.f32 %v596, %v830
      %v832 = vpop.f32.mrf.mxu0
      %v833 = vadd.f32 %v598, %v832
      %834 = vmatmul.bf16.gmra.mxu0 %v749
      %v835 = vpop.f32.mrf.mxu0
      %v836 = vadd.f32 %v601, %v835
      %v837 = vpop.f32.mrf.mxu0
      %v838 = vadd.f32 %v603, %v837
      %839 = vdwg.mxu0
      %s840 = scalar_lea.vmem %s264, 16
      %v841 = vld [vmem:[%s840] sm:$0xf]
      %v842 = vld [vmem:[%s840 + $0x4] sm:$0xf]
      %v843 = vld [vmem:[%s840 + $0x8] sm:$0xf]
      %v844 = vld [vmem:[%s840 + $0xc] sm:$0xf]
      %v845 = vld [vmem:[%s840 + $0x10] sm:$0xf]
      %v846 = vld [vmem:[%s840 + $0x14] sm:$0xf]
      %v847 = vld [vmem:[%s840 + $0x18] sm:$0xf]
      %v848 = vld [vmem:[%s840 + $0x1c] sm:$0xf]
      %v849 = vld [vmem:[%s840 + $0x20] sm:$0xf]
      %v850 = vld [vmem:[%s840 + $0x24] sm:$0xf]
      %v851 = vld [vmem:[%s840 + $0x28] sm:$0xf]
      %v852 = vld [vmem:[%s840 + $0x2c] sm:$0xf]
      %v853 = vld [vmem:[%s840 + $0x30] sm:$0xf]
      %v854 = vld [vmem:[%s840 + $0x34] sm:$0xf]
      %v855 = vld [vmem:[%s840 + $0x38] sm:$0xf]
      %v856 = vld [vmem:[%s840 + $0x3c] sm:$0xf]
      %v857 = vld [vmem:[%s840 + $0x40] sm:$0xf]
      %v858 = vld [vmem:[%s840 + $0x44] sm:$0xf]
      %v859 = vld [vmem:[%s840 + $0x48] sm:$0xf]
      %v860 = vld [vmem:[%s840 + $0x4c] sm:$0xf]
      %v861 = vld [vmem:[%s840 + $0x50] sm:$0xf]
      %v862 = vld [vmem:[%s840 + $0x54] sm:$0xf]
      %v863 = vld [vmem:[%s840 + $0x58] sm:$0xf]
      %v864 = vld [vmem:[%s840 + $0x5c] sm:$0xf]
      %v865 = vld [vmem:[%s840 + $0x60] sm:$0xf]
      %v866 = vld [vmem:[%s840 + $0x64] sm:$0xf]
      %v867 = vld [vmem:[%s840 + $0x68] sm:$0xf]
      %v868 = vld [vmem:[%s840 + $0x6c] sm:$0xf]
      %v869 = vld [vmem:[%s840 + $0x70] sm:$0xf]
      %v870 = vld [vmem:[%s840 + $0x74] sm:$0xf]
      %v871 = vld [vmem:[%s840 + $0x78] sm:$0xf]
      %v872 = vld [vmem:[%s840 + $0x7c] sm:$0xf]
      %s873 = scalar_lea.vmem %s269, 48
      %v874 = vld [vmem:[%s873] sm:$0xf]
      %v875 = vld [vmem:[%s873 + $0x4] sm:$0xf]
      %v876 = vld [vmem:[%s873 + $0x8] sm:$0xf]
      %v877 = vld [vmem:[%s873 + $0xc] sm:$0xf]
      %v878 = vld [vmem:[%s873 + $0x10] sm:$0xf]
      %v879 = vld [vmem:[%s873 + $0x14] sm:$0xf]
      %v912 = vunpack.c.l.b16 %v841
      %v913 = vunpack.c.l.b16 %v842
      %v914 = vunpack.c.l.b16 %v843
      %v915 = vunpack.c.l.b16 %v844
      %v916 = vunpack.c.l.b16 %v845
      %v917 = vunpack.c.l.b16 %v846
      %v918 = vunpack.c.l.b16 %v847
      %v919 = vunpack.c.l.b16 %v848
      %v920 = vunpack.c.l.b16 %v849
      %v921 = vunpack.c.l.b16 %v850
      %v922 = vunpack.c.l.b16 %v851
      %v923 = vunpack.c.l.b16 %v852
      %v924 = vunpack.c.l.b16 %v853
      %v925 = vunpack.c.l.b16 %v854
      %v926 = vunpack.c.l.b16 %v855
      %v927 = vunpack.c.l.b16 %v856
      %v928 = vunpack.c.l.b16 %v857
      %v929 = vunpack.c.l.b16 %v858
      %v930 = vunpack.c.l.b16 %v859
      %v931 = vunpack.c.l.b16 %v860
      %v932 = vunpack.c.l.b16 %v861
      %v933 = vunpack.c.l.b16 %v862
      %v934 = vunpack.c.l.b16 %v863
      %v935 = vunpack.c.l.b16 %v864
      %v936 = vunpack.c.l.b16 %v865
      %v937 = vunpack.c.l.b16 %v866
      %v938 = vunpack.c.l.b16 %v867
      %v939 = vunpack.c.l.b16 %v868
      %v940 = vunpack.c.l.b16 %v869
      %v941 = vunpack.c.l.b16 %v870
      %v942 = vunpack.c.l.b16 %v871
      %v943 = vunpack.c.l.b16 %v872
      %v944 = vpack.c.b16 %v913, %v912
      %v945 = vpack.c.b16 %v915, %v914
      %v946 = vpack.c.b16 %v917, %v916
      %v947 = vpack.c.b16 %v919, %v918
      %v948 = vpack.c.b16 %v921, %v920
      %v949 = vpack.c.b16 %v923, %v922
      %v950 = vpack.c.b16 %v925, %v924
      %v951 = vpack.c.b16 %v927, %v926
      %v952 = vpack.c.b16 %v929, %v928
      %v953 = vpack.c.b16 %v931, %v930
      %v954 = vpack.c.b16 %v933, %v932
      %v955 = vpack.c.b16 %v935, %v934
      %v956 = vpack.c.b16 %v937, %v936
      %v957 = vpack.c.b16 %v939, %v938
      %v958 = vpack.c.b16 %v941, %v940
      %v959 = vpack.c.b16 %v943, %v942
      %v966 = vunpack.c.l.b16 %v874
      %v967 = vunpack.c.l.b16 %v875
      %v968 = vunpack.c.l.b16 %v876
      %v969 = vunpack.c.l.b16 %v877
      %v970 = vunpack.c.l.b16 %v878
      %v971 = vunpack.c.l.b16 %v879
      %v972 = vpack.c.b16 %v967, %v966
      %v973 = vpack.c.b16 %v969, %v968
      %v974 = vpack.c.b16 %v971, %v970
      %v979 = vsel %vm467, %v944, 0
      %v982 = vsel %vm467, %v945, 0
      %v985 = vsel %vm467, %v946, 0
      %v988 = vsel %vm467, %v947, 0
      %v991 = vsel %vm467, %v948, 0
      %v994 = vsel %vm467, %v949, 0
      %v997 = vsel %vm467, %v950, 0
      %v1000 = vsel %vm467, %v951, 0
      %v1003 = vsel %vm467, %v952, 0
      %v1006 = vsel %vm467, %v953, 0
      %v1009 = vsel %vm467, %v954, 0
      %v1012 = vsel %vm467, %v955, 0
      %v1015 = vsel %vm467, %v956, 0
      %v1018 = vsel %vm467, %v957, 0
      %v1021 = vsel %vm467, %v958, 0
      %v1024 = vsel %vm467, %v959, 0
      %1026 = vmatpush.bf16.msra.mxu0 0
      %1027 = vmatpush.bf16.msra.mxu0 0
      %1028 = vmatpush.bf16.msra.mxu0 0
      %1029 = vmatpush.bf16.msra.mxu0 0
      %1030 = vmatpush.bf16.msra.mxu0 0
      %1031 = vmatpush.bf16.msra.mxu0 %v974
      %1032 = vmatpush.bf16.msra.mxu0 %v973
      %1033 = vmatpush.bf16.msra.mxu0 %v972
      %1034 = vmatmul.bf16.gmra.mxu0 %v979
      %v1035 = vpop.f32.mrf.mxu0
      %v1036 = vadd.f32 0.0, %v1035
      %v1037 = vpop.f32.mrf.mxu0
      %v1038 = vadd.f32 0.0, %v1037
      %1039 = vmatmul.bf16.gmra.mxu0 %v982
      %v1040 = vpop.f32.mrf.mxu0
      %v1041 = vadd.f32 0.0, %v1040
      %v1042 = vpop.f32.mrf.mxu0
      %v1043 = vadd.f32 0.0, %v1042
      %1044 = vmatmul.bf16.gmra.mxu0 %v985
      %v1045 = vpop.f32.mrf.mxu0
      %v1046 = vadd.f32 0.0, %v1045
      %v1047 = vpop.f32.mrf.mxu0
      %v1048 = vadd.f32 0.0, %v1047
      %1049 = vmatmul.bf16.gmra.mxu0 %v988
      %v1050 = vpop.f32.mrf.mxu0
      %v1051 = vadd.f32 0.0, %v1050
      %v1052 = vpop.f32.mrf.mxu0
      %v1053 = vadd.f32 0.0, %v1052
      %1054 = vmatmul.bf16.gmra.mxu0 %v991
      %v1055 = vpop.f32.mrf.mxu0
      %v1056 = vadd.f32 0.0, %v1055
      %v1057 = vpop.f32.mrf.mxu0
      %v1058 = vadd.f32 0.0, %v1057
      %1059 = vmatmul.bf16.gmra.mxu0 %v994
      %v1060 = vpop.f32.mrf.mxu0
      %v1061 = vadd.f32 0.0, %v1060
      %v1062 = vpop.f32.mrf.mxu0
      %v1063 = vadd.f32 0.0, %v1062
      %1064 = vmatmul.bf16.gmra.mxu0 %v997
      %v1065 = vpop.f32.mrf.mxu0
      %v1066 = vadd.f32 0.0, %v1065
      %v1067 = vpop.f32.mrf.mxu0
      %v1068 = vadd.f32 0.0, %v1067
      %1069 = vmatmul.bf16.gmra.mxu0 %v1000
      %v1070 = vpop.f32.mrf.mxu0
      %v1071 = vadd.f32 0.0, %v1070
      %v1072 = vpop.f32.mrf.mxu0
      %v1073 = vadd.f32 0.0, %v1072
      %1074 = vmatmul.bf16.gmra.mxu0 %v1003
      %v1075 = vpop.f32.mrf.mxu0
      %v1076 = vadd.f32 0.0, %v1075
      %v1077 = vpop.f32.mrf.mxu0
      %v1078 = vadd.f32 0.0, %v1077
      %1079 = vmatmul.bf16.gmra.mxu0 %v1006
      %v1080 = vpop.f32.mrf.mxu0
      %v1081 = vadd.f32 0.0, %v1080
      %v1082 = vpop.f32.mrf.mxu0
      %v1083 = vadd.f32 0.0, %v1082
      %1084 = vmatmul.bf16.gmra.mxu0 %v1009
      %v1085 = vpop.f32.mrf.mxu0
      %v1086 = vadd.f32 0.0, %v1085
      %v1087 = vpop.f32.mrf.mxu0
      %v1088 = vadd.f32 0.0, %v1087
      %1089 = vmatmul.bf16.gmra.mxu0 %v1012
      %v1090 = vpop.f32.mrf.mxu0
      %v1091 = vadd.f32 0.0, %v1090
      %v1092 = vpop.f32.mrf.mxu0
      %v1093 = vadd.f32 0.0, %v1092
      %1094 = vmatmul.bf16.gmra.mxu0 %v1015
      %v1095 = vpop.f32.mrf.mxu0
      %v1096 = vadd.f32 0.0, %v1095
      %v1097 = vpop.f32.mrf.mxu0
      %v1098 = vadd.f32 0.0, %v1097
      %1099 = vmatmul.bf16.gmra.mxu0 %v1018
      %v1100 = vpop.f32.mrf.mxu0
      %v1101 = vadd.f32 0.0, %v1100
      %v1102 = vpop.f32.mrf.mxu0
      %v1103 = vadd.f32 0.0, %v1102
      %1104 = vmatmul.bf16.gmra.mxu0 %v1021
      %v1105 = vpop.f32.mrf.mxu0
      %v1106 = vadd.f32 0.0, %v1105
      %v1107 = vpop.f32.mrf.mxu0
      %v1108 = vadd.f32 0.0, %v1107
      %1109 = vmatmul.bf16.gmra.mxu0 %v1024
      %v1110 = vpop.f32.mrf.mxu0
      %v1111 = vadd.f32 0.0, %v1110
      %v1112 = vpop.f32.mrf.mxu0
      %v1113 = vadd.f32 0.0, %v1112
      %1114 = vdwg.mxu0
      %v1115 = vadd.f32 %v761, %v1036
      %v1116 = vadd.f32 %v763, %v1038
      %v1117 = vadd.f32 %v766, %v1041
      %v1118 = vadd.f32 %v768, %v1043
      %v1119 = vadd.f32 %v771, %v1046
      %v1120 = vadd.f32 %v773, %v1048
      %v1121 = vadd.f32 %v776, %v1051
      %v1122 = vadd.f32 %v778, %v1053
      %v1123 = vadd.f32 %v781, %v1056
      %v1124 = vadd.f32 %v783, %v1058
      %v1125 = vadd.f32 %v786, %v1061
      %v1126 = vadd.f32 %v788, %v1063
      %v1127 = vadd.f32 %v791, %v1066
      %v1128 = vadd.f32 %v793, %v1068
      %v1129 = vadd.f32 %v796, %v1071
      %v1130 = vadd.f32 %v798, %v1073
      %v1131 = vadd.f32 %v801, %v1076
      %v1132 = vadd.f32 %v803, %v1078
      %v1133 = vadd.f32 %v806, %v1081
      %v1134 = vadd.f32 %v808, %v1083
      %v1135 = vadd.f32 %v811, %v1086
      %v1136 = vadd.f32 %v813, %v1088
      %v1137 = vadd.f32 %v816, %v1091
      %v1138 = vadd.f32 %v818, %v1093
      %v1139 = vadd.f32 %v821, %v1096
      %v1140 = vadd.f32 %v823, %v1098
      %v1141 = vadd.f32 %v826, %v1101
      %v1142 = vadd.f32 %v828, %v1103
      %v1143 = vadd.f32 %v831, %v1106
      %v1144 = vadd.f32 %v833, %v1108
      %v1145 = vadd.f32 %v836, %v1111
      %v1146 = vadd.f32 %v838, %v1113
      %v1147 = vld [vmem:[%s272] sm:$0x1]
      %v1149 = vperm.slane %v1147, 0
      %v1151 = vmul.f32 %v1115, %v1149
      %v1152 = vmul.f32 %v1116, %v1149
      %v1153 = vmul.f32 %v1117, %v1149
      %v1154 = vmul.f32 %v1118, %v1149
      %v1155 = vmul.f32 %v1119, %v1149
      %v1156 = vmul.f32 %v1120, %v1149
      %v1157 = vmul.f32 %v1121, %v1149
      %v1158 = vmul.f32 %v1122, %v1149
      %v1159 = vmul.f32 %v1123, %v1149
      %v1160 = vmul.f32 %v1124, %v1149
      %v1161 = vmul.f32 %v1125, %v1149
      %v1162 = vmul.f32 %v1126, %v1149
      %v1163 = vmul.f32 %v1127, %v1149
      %v1164 = vmul.f32 %v1128, %v1149
      %v1165 = vmul.f32 %v1129, %v1149
      %v1166 = vmul.f32 %v1130, %v1149
      %v1167 = vmul.f32 %v1131, %v1149
      %v1168 = vmul.f32 %v1132, %v1149
      %v1169 = vmul.f32 %v1133, %v1149
      %v1170 = vmul.f32 %v1134, %v1149
      %v1171 = vmul.f32 %v1135, %v1149
      %v1172 = vmul.f32 %v1136, %v1149
      %v1173 = vmul.f32 %v1137, %v1149
      %v1174 = vmul.f32 %v1138, %v1149
      %v1175 = vmul.f32 %v1139, %v1149
      %v1176 = vmul.f32 %v1140, %v1149
      %v1177 = vmul.f32 %v1141, %v1149
      %v1178 = vmul.f32 %v1142, %v1149
      %v1179 = vmul.f32 %v1143, %v1149
      %v1180 = vmul.f32 %v1144, %v1149
      %v1181 = vmul.f32 %v1145, %v1149
      %v1182 = vmul.f32 %v1146, %v1149
      %v1183 = vld [vmem:[%s275] sm:$0x1]
      %v1185 = vperm.slane %v1183, 0
      %v1187 = vadd.f32 %v1151, %v1185
      %v1188 = vadd.f32 %v1152, %v1185
      %v1189 = vadd.f32 %v1153, %v1185
      %v1190 = vadd.f32 %v1154, %v1185
      %v1191 = vadd.f32 %v1155, %v1185
      %v1192 = vadd.f32 %v1156, %v1185
      %v1193 = vadd.f32 %v1157, %v1185
      %v1194 = vadd.f32 %v1158, %v1185
      %v1195 = vadd.f32 %v1159, %v1185
      %v1196 = vadd.f32 %v1160, %v1185
      %v1197 = vadd.f32 %v1161, %v1185
      %v1198 = vadd.f32 %v1162, %v1185
      %v1199 = vadd.f32 %v1163, %v1185
      %v1200 = vadd.f32 %v1164, %v1185
      %v1201 = vadd.f32 %v1165, %v1185
      %v1202 = vadd.f32 %v1166, %v1185
      %v1203 = vadd.f32 %v1167, %v1185
      %v1204 = vadd.f32 %v1168, %v1185
      %v1205 = vadd.f32 %v1169, %v1185
      %v1206 = vadd.f32 %v1170, %v1185
      %v1207 = vadd.f32 %v1171, %v1185
      %v1208 = vadd.f32 %v1172, %v1185
      %v1209 = vadd.f32 %v1173, %v1185
      %v1210 = vadd.f32 %v1174, %v1185
      %v1211 = vadd.f32 %v1175, %v1185
      %v1212 = vadd.f32 %v1176, %v1185
      %v1213 = vadd.f32 %v1177, %v1185
      %v1214 = vadd.f32 %v1178, %v1185
      %v1215 = vadd.f32 %v1179, %v1185
      %v1216 = vadd.f32 %v1180, %v1185
      %v1217 = vadd.f32 %v1181, %v1185
      %v1218 = vadd.f32 %v1182, %v1185
      %v1219 = vmax.f32 %v1187, 0.0
      %v1220 = vmax.f32 %v1188, 0.0
      %v1221 = vmax.f32 %v1189, 0.0
      %v1222 = vmax.f32 %v1190, 0.0
      %v1223 = vmax.f32 %v1191, 0.0
      %v1224 = vmax.f32 %v1192, 0.0
      %v1225 = vmax.f32 %v1193, 0.0
      %v1226 = vmax.f32 %v1194, 0.0
      %v1227 = vmax.f32 %v1195, 0.0
      %v1228 = vmax.f32 %v1196, 0.0
      %v1229 = vmax.f32 %v1197, 0.0
      %v1230 = vmax.f32 %v1198, 0.0
      %v1231 = vmax.f32 %v1199, 0.0
      %v1232 = vmax.f32 %v1200, 0.0
      %v1233 = vmax.f32 %v1201, 0.0
      %v1234 = vmax.f32 %v1202, 0.0
      %v1235 = vmax.f32 %v1203, 0.0
      %v1236 = vmax.f32 %v1204, 0.0
      %v1237 = vmax.f32 %v1205, 0.0
      %v1238 = vmax.f32 %v1206, 0.0
      %v1239 = vmax.f32 %v1207, 0.0
      %v1240 = vmax.f32 %v1208, 0.0
      %v1241 = vmax.f32 %v1209, 0.0
      %v1242 = vmax.f32 %v1210, 0.0
      %v1243 = vmax.f32 %v1211, 0.0
      %v1244 = vmax.f32 %v1212, 0.0
      %v1245 = vmax.f32 %v1213, 0.0
      %v1246 = vmax.f32 %v1214, 0.0
      %v1247 = vmax.f32 %v1215, 0.0
      %v1248 = vmax.f32 %v1216, 0.0
      %v1249 = vmax.f32 %v1217, 0.0
      %v1250 = vmax.f32 %v1218, 0.0
      %v1251 = vpack.c.bf16 %v1219, %v1219
      %v1252 = vpack.c.bf16 %v1220, %v1220
      %v1253 = vpack.c.bf16 %v1221, %v1221
      %v1254 = vpack.c.bf16 %v1222, %v1222
      %v1255 = vpack.c.bf16 %v1223, %v1223
      %v1256 = vpack.c.bf16 %v1224, %v1224
      %v1257 = vpack.c.bf16 %v1225, %v1225
      %v1258 = vpack.c.bf16 %v1226, %v1226
      %v1259 = vpack.c.bf16 %v1227, %v1227
      %v1260 = vpack.c.bf16 %v1228, %v1228
      %v1261 = vpack.c.bf16 %v1229, %v1229
      %v1262 = vpack.c.bf16 %v1230, %v1230
      %v1263 = vpack.c.bf16 %v1231, %v1231
      %v1264 = vpack.c.bf16 %v1232, %v1232
      %v1265 = vpack.c.bf16 %v1233, %v1233
      %v1266 = vpack.c.bf16 %v1234, %v1234
      %v1267 = vpack.c.bf16 %v1235, %v1235
      %v1268 = vpack.c.bf16 %v1236, %v1236
      %v1269 = vpack.c.bf16 %v1237, %v1237
      %v1270 = vpack.c.bf16 %v1238, %v1238
      %v1271 = vpack.c.bf16 %v1239, %v1239
      %v1272 = vpack.c.bf16 %v1240, %v1240
      %v1273 = vpack.c.bf16 %v1241, %v1241
      %v1274 = vpack.c.bf16 %v1242, %v1242
      %v1275 = vpack.c.bf16 %v1243, %v1243
      %v1276 = vpack.c.bf16 %v1244, %v1244
      %v1277 = vpack.c.bf16 %v1245, %v1245
      %v1278 = vpack.c.bf16 %v1246, %v1246
      %v1279 = vpack.c.bf16 %v1247, %v1247
      %v1280 = vpack.c.bf16 %v1248, %v1248
      %v1281 = vpack.c.bf16 %v1249, %v1249
      %v1282 = vpack.c.bf16 %v1250, %v1250
      %1283 = vst [vmem:[%s288] sm:$0xf] %v1251
      %1284 = vst [vmem:[%s288 + $0x4] sm:$0xf] %v1252
      %1285 = vst [vmem:[%s288 + $0x8] sm:$0xf] %v1253
      %1286 = vst [vmem:[%s288 + $0xc] sm:$0xf] %v1254
      %1287 = vst [vmem:[%s288 + $0x10] sm:$0xf] %v1255
      %1288 = vst [vmem:[%s288 + $0x14] sm:$0xf] %v1256
      %1289 = vst [vmem:[%s288 + $0x18] sm:$0xf] %v1257
      %1290 = vst [vmem:[%s288 + $0x1c] sm:$0xf] %v1258
      %1291 = vst [vmem:[%s288 + $0x20] sm:$0xf] %v1259
      %1292 = vst [vmem:[%s288 + $0x24] sm:$0xf] %v1260
      %1293 = vst [vmem:[%s288 + $0x28] sm:$0xf] %v1261
      %1294 = vst [vmem:[%s288 + $0x2c] sm:$0xf] %v1262
      %1295 = vst [vmem:[%s288 + $0x30] sm:$0xf] %v1263
      %1296 = vst [vmem:[%s288 + $0x34] sm:$0xf] %v1264
      %1297 = vst [vmem:[%s288 + $0x38] sm:$0xf] %v1265
      %1298 = vst [vmem:[%s288 + $0x3c] sm:$0xf] %v1266
      %1299 = vst [vmem:[%s288 + $0x40] sm:$0xf] %v1267
      %1300 = vst [vmem:[%s288 + $0x44] sm:$0xf] %v1268
      %1301 = vst [vmem:[%s288 + $0x48] sm:$0xf] %v1269
      %1302 = vst [vmem:[%s288 + $0x4c] sm:$0xf] %v1270
      %1303 = vst [vmem:[%s288 + $0x50] sm:$0xf] %v1271
      %1304 = vst [vmem:[%s288 + $0x54] sm:$0xf] %v1272
      %1305 = vst [vmem:[%s288 + $0x58] sm:$0xf] %v1273
      %1306 = vst [vmem:[%s288 + $0x5c] sm:$0xf] %v1274
      %1307 = vst [vmem:[%s288 + $0x60] sm:$0xf] %v1275
      %1308 = vst [vmem:[%s288 + $0x64] sm:$0xf] %v1276
      %1309 = vst [vmem:[%s288 + $0x68] sm:$0xf] %v1277
      %1310 = vst [vmem:[%s288 + $0x6c] sm:$0xf] %v1278
      %1311 = vst [vmem:[%s288 + $0x70] sm:$0xf] %v1279
      %1312 = vst [vmem:[%s288 + $0x74] sm:$0xf] %v1280
      %1313 = vst [vmem:[%s288 + $0x78] sm:$0xf] %v1281
      %1314 = vst [vmem:[%s288 + $0x7c] sm:$0xf] %v1282
      %s1315 = smul.u32 16, %s22
      %p1316 = scmp.lt.s32.totalorder %s20, 1
      %s1317 = scalar_select %p1316, %s20, 1
      %p1318 = scmp.lt.s32.totalorder %s1315, 15
      %s1319 = scalar_select %p1318, %s1315, 15
      %p1320 = scmp.lt.s32.totalorder %s21, 0
      %s1321 = scalar_select %p1320, %s21, 0
      %s1322 = smul.addr %s1319, 2
      %s1323 = sadd.s32 %s1321, %s1322
      %s1324 = smul.addr %s1317, 32
      %s1325 = sadd.s32 %s1323, %s1324
      %s1326 = smul.addr %s1325, 4
      %s1327 = scalar_lea.vmem %s4, %s1326
      // Predicated region
      $region37: #{double_conv.2} parent=35 // pred_check
        %p1328 = pneg %p162
      $region38: #{double_conv.2} parent=35 // pred_check_branch
        %1330 = sbr.rel (%p1328) target = $region40
      $region39: #{double_conv.2} parent=35 // pred_region
        %s1331 = smul.u32 16, %s22
      $region40: #{double_conv.2} parent=35 // pred_fallthru
        _
    $region36: #{double_conv.2} parent=5 // pred_fallthru
      _
    %p1332 = scmp.le.s32.totalorder 2, %s10
    // Predicated region
    $region41: #{double_conv.2} parent=5 // pred_check
      %p1333 = pneg %p1332
    $region42: #{double_conv.2} parent=5 // pred_check_branch
      %1335 = sbr.rel (%p1333) target = $region44
    $region43: #{double_conv.2} parent=5 // pred_region
      %s1336 = ssub.s32 %s10, 2
      // Predicated region
      $region45: #{double_conv.2} parent=43 // pred_check
        %p1337 = pneg %p168
      $region46: #{double_conv.2} parent=43 // pred_check_branch
        %1339 = sbr.rel (%p1337) target = $region48
      $region47: #{double_conv.2} parent=43 // pred_region
        %s1340 = smul.u32 16, %s25
        %p1341 = scmp.lt.s32.totalorder %s23, 1
        %s1342 = scalar_select %p1341, %s23, 1
        %p1343 = scmp.lt.s32.totalorder %s1340, 15
        %s1344 = scalar_select %p1343, %s1340, 15
        %p1345 = scmp.lt.s32.totalorder %s24, 0
        %s1346 = scalar_select %p1345, %s24, 0
        %s1347 = smul.addr %s1344, 2
        %s1348 = sadd.s32 %s1346, %s1347
        %s1349 = smul.addr %s1342, 32
        %s1350 = sadd.s32 %s1348, %s1349
        %s1351 = smul.addr %s1350, 4
        %s1352 = scalar_lea.vmem %s4, %s1351
      $region48: #{double_conv.2} parent=43 // pred_fallthru
        _
    $region44: #{double_conv.2} parent=5 // pred_fallthru
      _
  $region6: #{double_conv.2} parent=0 // loop_footer
    %s14 = sadd.s32 1, %s10
  $region7: #{double_conv.2} parent=0 // loop_footer_branch
    %9 = sbr.rel target = $region3
  $region8: #{double_conv.2} parent=0 // loop_exit
    _

// kernel: double_conv.3
$region0: #{double_conv.3}
  #allocation0 [shape = 'u32[]', space=smem, size = 0x4, offset = 0x4, fixed_abs, tag = 'smem constant byte address 0x4 - core index']
  #allocation1 [shape = 'u32[72,128]{1,0:T(1,128)}', space=vmem, size = 0x9000, scoped, tag = 'internal scratch']
  %s0 = inlined_call_operand.vmem [shape: bf16[2,18,16,96], index: 0, kind: input, shape index: {}]
  %s1 = inlined_call_operand.vmem [shape: bf16[3,96,128], index: 1, kind: input, shape index: {}]
  %s2 = inlined_call_operand.vmem [shape: f32[1,128], index: 2, kind: input, shape index: {}]
  %s3 = inlined_call_operand.vmem [shape: f32[1,128], index: 3, kind: input, shape index: {}]
  %s4 = inlined_call_operand.vmem [shape: f32[2,16,16,128], index: 4, kind: output, shape index: {}]
  %s5 = sld [smem:[#allocation0]]
  $region49: #{double_conv.3} parent=0
    _
  %s7 = ssub.s32 1, %s5
  %s8 = scalar_select 0, %s7, %s5
  loop: start=0, step=1, limit=4
  $region2: #{double_conv.3} parent=0 // loop_pre_header
    _
  $region3: #{double_conv.3} parent=0 // loop_header
    %s10 = sphi 0, %s14
    %p11 = scmp.ge.s32.totalorder %s10, 4
    %s17 = sphi 0, %s36
    %s18 = sphi 0, %s32
    %s19 = sphi 0, %s28
    %s20 = sphi 0, %s17
    %s21 = sphi 0, %s18
    %s22 = sphi 0, %s19
    %s23 = sphi 0, %s20
    %s24 = sphi 0, %s21
    %s25 = sphi 0, %s22
    %s41 = sphi 0, %s43
    %s44 = sphi 0, %s41
    %s45 = sphi 0, %s44
    %s61 = sphi 0, %s45
    %s67 = sphi 0, %s69
    %s70 = sphi 0, %s67
    %s71 = sphi 0, %s70
    %s87 = sphi 0, %s71
    %s93 = sphi 0, %s95
    %s96 = sphi 0, %s93
    %s97 = sphi 0, %s96
    %s113 = sphi 0, %s97
    %s119 = sphi 0, %s121
    %s122 = sphi 0, %s119
    %s123 = sphi 0, %s122
    %s139 = sphi 0, %s123
    %s149 = sphi 0, %s151
    %s152 = sphi 0, %s149
    %s153 = sphi 0, %s152
    %s169 = sphi 0, %s153
  $region4: #{double_conv.3} parent=0 // loop_header_branch
    %13 = sbr.rel (%p11) target = $region8
  $region5: #{double_conv.3} parent=0 // loop_body
    %s15 = ssub.s32 %s10, 1
    %s16 = ssub.s32 %s10, 2
    %s26 = sadd.s32 1, %s19
    %p27 = scmp.ge.s32.totalorder %s26, 1
    %s28 = scalar_select %p27, 0, %s26
    %s29 = sadd.s32 1, %s18
    %s30 = scalar_select %p27, %s29, %s18
    %p31 = scmp.ge.s32.totalorder %s30, 1
    %s32 = scalar_select %p31, 0, %s30
    %s33 = sadd.s32 1, %s17
    %s34 = scalar_select %p31, %s33, %s17
    %p35 = scmp.ge.s32.totalorder %s34, 2
    %s36 = scalar_select %p35, 0, %s34
    %s37 = sadd.s32 %s17, %s19
    %s38 = sadd.s32 %s36, %s28
    %s39 = ssub.s32 %s37, %s38
    %p40 = scmp.eq.s32.totalorder %s39, 0
    %s42 = sadd.s32 %s41, 1
    %s43 = scalar_select %p40, %s41, %s42
    %p46 = pneg %p40
    %p47 = scmp.eq.s32.totalorder %s10, 1
    %p48 = por %p46, %p47
    %p49 = scmp.ne.s32.totalorder %s41, %s44
    %p50 = scmp.eq.s32.totalorder %s10, 0
    %p51 = por %p49, %p50
    %p52 = scmp.ne.s32.totalorder %s41, %s44
    %p53 = scmp.eq.s32.totalorder %s15, 1
    %p54 = por %p52, %p53
    %p55 = scmp.ne.s32.totalorder %s44, %s45
    %p56 = scmp.eq.s32.totalorder %s15, 0
    %p57 = por %p55, %p56
    %p58 = scmp.ne.s32.totalorder %s44, %s45
    %p59 = scmp.eq.s32.totalorder %s16, 1
    %p60 = por %p58, %p59
    %p62 = scmp.ne.s32.totalorder %s45, %s61
    %p63 = scmp.eq.s32.totalorder %s16, 0
    %p64 = por %p62, %p63
    %s65 = ssub.s32 %s18, %s32
    %p66 = scmp.eq.s32.totalorder %s65, 0
    %s68 = sadd.s32 %s67, 1
    %s69 = scalar_select %p66, %s67, %s68
    %p72 = pneg %p66
    %p73 = scmp.eq.s32.totalorder %s10, 1
    %p74 = por %p72, %p73
    %p75 = scmp.ne.s32.totalorder %s67, %s70
    %p76 = scmp.eq.s32.totalorder %s10, 0
    %p77 = por %p75, %p76
    %p78 = scmp.ne.s32.totalorder %s67, %s70
    %p79 = scmp.eq.s32.totalorder %s15, 1
    %p80 = por %p78, %p79
    %p81 = scmp.ne.s32.totalorder %s70, %s71
    %p82 = scmp.eq.s32.totalorder %s15, 0
    %p83 = por %p81, %p82
    %p84 = scmp.ne.s32.totalorder %s70, %s71
    %p85 = scmp.eq.s32.totalorder %s16, 1
    %p86 = por %p84, %p85
    %p88 = scmp.ne.s32.totalorder %s71, %s87
    %p89 = scmp.eq.s32.totalorder %s16, 0
    %p90 = por %p88, %p89
    %s91 = ssub.s32 %s18, %s32
    %p92 = scmp.eq.s32.totalorder %s91, 0
    %s94 = sadd.s32 %s93, 1
    %s95 = scalar_select %p92, %s93, %s94
    %p98 = pneg %p92
    %p99 = scmp.eq.s32.totalorder %s10, 1
    %p100 = por %p98, %p99
    %p101 = scmp.ne.s32.totalorder %s93, %s96
    %p102 = scmp.eq.s32.totalorder %s10, 0
    %p103 = por %p101, %p102
    %p104 = scmp.ne.s32.totalorder %s93, %s96
    %p105 = scmp.eq.s32.totalorder %s15, 1
    %p106 = por %p104, %p105
    %p107 = scmp.ne.s32.totalorder %s96, %s97
    %p108 = scmp.eq.s32.totalorder %s15, 0
    %p109 = por %p107, %p108
    %p110 = scmp.ne.s32.totalorder %s96, %s97
    %p111 = scmp.eq.s32.totalorder %s16, 1
    %p112 = por %p110, %p111
    %p114 = scmp.ne.s32.totalorder %s97, %s113
    %p115 = scmp.eq.s32.totalorder %s16, 0
    %p116 = por %p114, %p115
    %s117 = ssub.s32 %s18, %s32
    %p118 = scmp.eq.s32.totalorder %s117, 0
    %s120 = sadd.s32 %s119, 1
    %s121 = scalar_select %p118, %s119, %s120
    %p124 = pneg %p118
    %p125 = scmp.eq.s32.totalorder %s10, 1
    %p126 = por %p124, %p125
    %p127 = scmp.ne.s32.totalorder %s119, %s122
    %p128 = scmp.eq.s32.totalorder %s10, 0
    %p129 = por %p127, %p128
    %p130 = scmp.ne.s32.totalorder %s119, %s122
    %p131 = scmp.eq.s32.totalorder %s15, 1
    %p132 = por %p130, %p131
    %p133 = scmp.ne.s32.totalorder %s122, %s123
    %p134 = scmp.eq.s32.totalorder %s15, 0
    %p135 = por %p133, %p134
    %p136 = scmp.ne.s32.totalorder %s122, %s123
    %p137 = scmp.eq.s32.totalorder %s16, 1
    %p138 = por %p136, %p137
    %p140 = scmp.ne.s32.totalorder %s123, %s139
    %p141 = scmp.eq.s32.totalorder %s16, 0
    %p142 = por %p140, %p141
    %s143 = ssub.s32 %s17, %s36
    %s144 = ssub.s32 %s19, %s28
    %s145 = sor.u32 %s143, %s144
    %s146 = ssub.s32 %s18, %s32
    %s147 = sor.u32 %s145, %s146
    %p148 = scmp.eq.s32.totalorder %s147, 0
    %s150 = sadd.s32 %s149, 1
    %s151 = scalar_select %p148, %s149, %s150
    %p154 = pneg %p148
    %p155 = scmp.eq.s32.totalorder %s10, 1
    %p156 = por %p154, %p155
    %p157 = scmp.ne.s32.totalorder %s149, %s152
    %p158 = scmp.eq.s32.totalorder %s10, 0
    %p159 = por %p157, %p158
    %p160 = scmp.ne.s32.totalorder %s149, %s152
    %p161 = scmp.eq.s32.totalorder %s15, 1
    %p162 = por %p160, %p161
    %p163 = scmp.ne.s32.totalorder %s152, %s153
    %p164 = scmp.eq.s32.totalorder %s15, 0
    %p165 = por %p163, %p164
    %p166 = scmp.ne.s32.totalorder %s152, %s153
    %p167 = scmp.eq.s32.totalorder %s16, 1
    %p168 = por %p166, %p167
    %p170 = scmp.ne.s32.totalorder %s153, %s169
    %p171 = scmp.eq.s32.totalorder %s16, 0
    %p172 = por %p170, %p171
    %p173 = scmp.le.s32.totalorder 1, %s10
    %p174 = scmp.lt.s32.totalorder %s10, 3
    %p175 = pnand %p173, %p174
    %p176 = pneg %p175
    // Predicated region
    $region9: #{double_conv.3} parent=5 // pred_check
      _
    $region10: #{double_conv.3} parent=5 // pred_check_branch
      %178 = sbr.rel (%p175) target = $region12
    $region11: #{double_conv.3} parent=5 // pred_region
      %s179 = ssub.s32 %s10, 1
      // Predicated region
      $region13: #{double_conv.3} parent=11 // pred_check
        %p180 = pneg %p83
      $region14: #{double_conv.3} parent=11 // pred_check_branch
        %182 = sbr.rel (%p180) target = $region16
      $region15: #{double_conv.3} parent=11 // pred_region
        %p183 = scmp.lt.s32.totalorder %s21, 0
        %s184 = scalar_select %p183, %s21, 0
        %s185 = smul.addr %s184, 4
        %s186 = scalar_lea.vmem %s1, %s185
      $region16: #{double_conv.3} parent=11 // pred_fallthru
        _
      // Predicated region
      $region17: #{double_conv.3} parent=11 // pred_check
        %p187 = pneg %p109
      $region18: #{double_conv.3} parent=11 // pred_check_branch
        %189 = sbr.rel (%p187) target = $region20
      $region19: #{double_conv.3} parent=11 // pred_region
        %p190 = scmp.lt.s32.totalorder %s21, 0
        %s191 = scalar_select %p190, %s21, 0
        %s192 = scalar_lea.vmem %s2, %s191
      $region20: #{double_conv.3} parent=11 // pred_fallthru
        _
      // Predicated region
      $region21: #{double_conv.3} parent=11 // pred_check
        %p193 = pneg %p135
      $region22: #{double_conv.3} parent=11 // pred_check_branch
        %195 = sbr.rel (%p193) target = $region24
      $region23: #{double_conv.3} parent=11 // pred_region
        %p196 = scmp.lt.s32.totalorder %s21, 0
        %s197 = scalar_select %p196, %s21, 0
        %s198 = scalar_lea.vmem %s3, %s197
      $region24: #{double_conv.3} parent=11 // pred_fallthru
        _
    $region12: #{double_conv.3} parent=5 // pred_fallthru
      _
    %p199 = scmp.lt.s32.totalorder %s10, 2
    // Predicated region
    $region25: #{double_conv.3} parent=5 // pred_check
      %p200 = pneg %p199
    $region26: #{double_conv.3} parent=5 // pred_check_branch
      %202 = sbr.rel (%p200) target = $region28
    $region27: #{double_conv.3} parent=5 // pred_region
      // Predicated region
      $region29: #{double_conv.3} parent=27 // pred_check
        %p203 = pneg %p51
      $region30: #{double_conv.3} parent=27 // pred_check_branch
        %205 = sbr.rel (%p203) target = $region32
      $region31: #{double_conv.3} parent=27 // pred_region
        %s206 = sadd.s32 %s17, %s19
        %p207 = scmp.lt.s32.totalorder %s206, 1
        %s208 = scalar_select %p207, %s206, 1
        %s209 = smul.addr %s208, 36
        %s210 = smul.addr %s209, 4
        %s211 = scalar_lea.vmem %s0, %s210
        %s212 = sadd.s32 %s17, %s19
      $region32: #{double_conv.3} parent=27 // pred_fallthru
        _
    $region28: #{double_conv.3} parent=5 // pred_fallthru
      _
    %p213 = scmp.le.s32.totalorder 1, %s10
    %p214 = scmp.lt.s32.totalorder %s10, 3
    %p215 = pnand %p213, %p214
    %p216 = pneg %p215
    // Predicated region
    $region33: #{double_conv.3} parent=5 // pred_check
      _
    $region34: #{double_conv.3} parent=5 // pred_check_branch
      %218 = sbr.rel (%p215) target = $region36
    $region35: #{double_conv.3} parent=5 // pred_region
      %s219 = ssub.s32 %s10, 1
      %s220 = sadd.s32 %s20, %s22
      %p221 = scmp.lt.s32.totalorder %s220, 1
      %s222 = scalar_select %p221, %s220, 1
      %s223 = smul.addr %s222, 36
      %s224 = smul.addr %s223, 4
      %s225 = scalar_lea.vmem %s0, %s224
      %p226 = pneg %p57
      %p227 = pneg %p54
      %p228 = scmp.lt.s32.totalorder %s21, 0
      %s229 = scalar_select %p228, %s21, 0
      %s230 = smul.addr %s229, 4
      %s231 = scalar_lea.vmem %s1, %s230
      %p232 = pneg %p83
      %p233 = pneg %p80
      %p234 = scmp.lt.s32.totalorder %s21, 0
      %s235 = scalar_select %p234, %s21, 0
      %s236 = scalar_lea.vmem %s2, %s235
      %p237 = pneg %p109
      %p238 = pneg %p106
      %p239 = scmp.lt.s32.totalorder %s21, 0
      %s240 = scalar_select %p239, %s21, 0
      %s241 = scalar_lea.vmem %s3, %s240
      %p242 = pneg %p135
      %p243 = pneg %p132
      %p244 = pneg %p165
      %p245 = pneg %p162
      %s246 = smul.u32 16, %s22
      %p247 = scmp.lt.s32.totalorder %s20, 1
      %s248 = scalar_select %p247, %s20, 1
      %p249 = scmp.lt.s32.totalorder %s246, 15
      %s250 = scalar_select %p249, %s246, 15
      %p251 = scmp.lt.s32.totalorder %s21, 0
      %s252 = scalar_select %p251, %s21, 0
      %s253 = smul.addr %s250, 2
      %s254 = sadd.s32 %s252, %s253
      %s255 = smul.addr %s248, 32
      %s256 = sadd.s32 %s254, %s255
      %s257 = smul.addr %s256, 8
      %s258 = scalar_lea.vmem %s4, %s257
      %s259 = sadd.s32 %s20, %s22
      %p260 = scmp.lt.s32.totalorder %s259, 1
      %s261 = scalar_select %p260, %s259, 1
      %s262 = smul.addr %s261, 36
      %s263 = smul.addr %s262, 4
      %s264 = scalar_lea.vmem %s0, %s263
      %s265 = sadd.s32 %s20, %s22
      %p266 = scmp.lt.s32.totalorder %s21, 0
      %s267 = scalar_select %p266, %s21, 0
      %s268 = smul.addr %s267, 4
      %s269 = scalar_lea.vmem %s1, %s268
      %p270 = scmp.lt.s32.totalorder %s21, 0
      %s271 = scalar_select %p270, %s21, 0
      %s272 = scalar_lea.vmem %s2, %s271
      %p273 = scmp.lt.s32.totalorder %s21, 0
      %s274 = scalar_select %p273, %s21, 0
      %s275 = scalar_lea.vmem %s3, %s274
      %s276 = smul.u32 16, %s22
      %p277 = scmp.lt.s32.totalorder %s20, 1
      %s278 = scalar_select %p277, %s20, 1
      %p279 = scmp.lt.s32.totalorder %s276, 15
      %s280 = scalar_select %p279, %s276, 15
      %p281 = scmp.lt.s32.totalorder %s21, 0
      %s282 = scalar_select %p281, %s21, 0
      %s283 = smul.addr %s280, 2
      %s284 = sadd.s32 %s282, %s283
      %s285 = smul.addr %s278, 32
      %s286 = sadd.s32 %s284, %s285
      %s287 = smul.addr %s286, 8
      %s288 = scalar_lea.vmem %s4, %s287
      %s289 = smul.u32 16, %s22
      %v291 = vld [vmem:[%s264] sm:$0xf]
      %v292 = vld [vmem:[%s264 + $0x4] sm:$0xf]
      %v293 = vld [vmem:[%s264 + $0x8] sm:$0xf]
      %v294 = vld [vmem:[%s264 + $0xc] sm:$0xf]
      %v295 = vld [vmem:[%s264 + $0x10] sm:$0xf]
      %v296 = vld [vmem:[%s264 + $0x14] sm:$0xf]
      %v297 = vld [vmem:[%s264 + $0x18] sm:$0xf]
      %v298 = vld [vmem:[%s264 + $0x1c] sm:$0xf]
      %v299 = vld [vmem:[%s264 + $0x20] sm:$0xf]
      %v300 = vld [vmem:[%s264 + $0x24] sm:$0xf]
      %v301 = vld [vmem:[%s264 + $0x28] sm:$0xf]
      %v302 = vld [vmem:[%s264 + $0x2c] sm:$0xf]
      %v303 = vld [vmem:[%s264 + $0x30] sm:$0xf]
      %v304 = vld [vmem:[%s264 + $0x34] sm:$0xf]
      %v305 = vld [vmem:[%s264 + $0x38] sm:$0xf]
      %v306 = vld [vmem:[%s264 + $0x3c] sm:$0xf]
      %v307 = vld [vmem:[%s264 + $0x40] sm:$0xf]
      %v308 = vld [vmem:[%s264 + $0x44] sm:$0xf]
      %v309 = vld [vmem:[%s264 + $0x48] sm:$0xf]
      %v310 = vld [vmem:[%s264 + $0x4c] sm:$0xf]
      %v311 = vld [vmem:[%s264 + $0x50] sm:$0xf]
      %v312 = vld [vmem:[%s264 + $0x54] sm:$0xf]
      %v313 = vld [vmem:[%s264 + $0x58] sm:$0xf]
      %v314 = vld [vmem:[%s264 + $0x5c] sm:$0xf]
      %v315 = vld [vmem:[%s264 + $0x60] sm:$0xf]
      %v316 = vld [vmem:[%s264 + $0x64] sm:$0xf]
      %v317 = vld [vmem:[%s264 + $0x68] sm:$0xf]
      %v318 = vld [vmem:[%s264 + $0x6c] sm:$0xf]
      %v319 = vld [vmem:[%s264 + $0x70] sm:$0xf]
      %v320 = vld [vmem:[%s264 + $0x74] sm:$0xf]
      %v321 = vld [vmem:[%s264 + $0x78] sm:$0xf]
      %v322 = vld [vmem:[%s264 + $0x7c] sm:$0xf]
      %v323 = vld [vmem:[%s269] sm:$0xf]
      %v324 = vld [vmem:[%s269 + $0x4] sm:$0xf]
      %v325 = vld [vmem:[%s269 + $0x8] sm:$0xf]
      %v326 = vld [vmem:[%s269 + $0xc] sm:$0xf]
      %v327 = vld [vmem:[%s269 + $0x10] sm:$0xf]
      %v328 = vld [vmem:[%s269 + $0x14] sm:$0xf]
      %v329 = vld [vmem:[%s269 + $0x18] sm:$0xf]
      %v330 = vld [vmem:[%s269 + $0x1c] sm:$0xf]
      %v331 = vld [vmem:[%s269 + $0x20] sm:$0xf]
      %v332 = vld [vmem:[%s269 + $0x24] sm:$0xf]
      %v333 = vld [vmem:[%s269 + $0x28] sm:$0xf]
      %v334 = vld [vmem:[%s269 + $0x2c] sm:$0xf]
      %s335 = scalar_lea.vmem %s264, 8
      %v336 = vld [vmem:[%s335] sm:$0xf]
      %v337 = vld [vmem:[%s335 + $0x4] sm:$0xf]
      %v338 = vld [vmem:[%s335 + $0x8] sm:$0xf]
      %v339 = vld [vmem:[%s335 + $0xc] sm:$0xf]
      %v340 = vld [vmem:[%s335 + $0x10] sm:$0xf]
      %v341 = vld [vmem:[%s335 + $0x14] sm:$0xf]
      %v342 = vld [vmem:[%s335 + $0x18] sm:$0xf]
      %v343 = vld [vmem:[%s335 + $0x1c] sm:$0xf]
      %v344 = vld [vmem:[%s335 + $0x20] sm:$0xf]
      %v345 = vld [vmem:[%s335 + $0x24] sm:$0xf]
      %v346 = vld [vmem:[%s335 + $0x28] sm:$0xf]
      %v347 = vld [vmem:[%s335 + $0x2c] sm:$0xf]
      %v348 = vld [vmem:[%s335 + $0x30] sm:$0xf]
      %v349 = vld [vmem:[%s335 + $0x34] sm:$0xf]
      %v350 = vld [vmem:[%s335 + $0x38] sm:$0xf]
      %v351 = vld [vmem:[%s335 + $0x3c] sm:$0xf]
      %v352 = vld [vmem:[%s335 + $0x40] sm:$0xf]
      %v353 = vld [vmem:[%s335 + $0x44] sm:$0xf]
      %v354 = vld [vmem:[%s335 + $0x48] sm:$0xf]
      %v355 = vld [vmem:[%s335 + $0x4c] sm:$0xf]
      %v356 = vld [vmem:[%s335 + $0x50] sm:$0xf]
      %v357 = vld [vmem:[%s335 + $0x54] sm:$0xf]
      %v358 = vld [vmem:[%s335 + $0x58] sm:$0xf]
      %v359 = vld [vmem:[%s335 + $0x5c] sm:$0xf]
      %v360 = vld [vmem:[%s335 + $0x60] sm:$0xf]
      %v361 = vld [vmem:[%s335 + $0x64] sm:$0xf]
      %v362 = vld [vmem:[%s335 + $0x68] sm:$0xf]
      %v363 = vld [vmem:[%s335 + $0x6c] sm:$0xf]
      %v364 = vld [vmem:[%s335 + $0x70] sm:$0xf]
      %v365 = vld [vmem:[%s335 + $0x74] sm:$0xf]
      %v366 = vld [vmem:[%s335 + $0x78] sm:$0xf]
      %v367 = vld [vmem:[%s335 + $0x7c] sm:$0xf]
      %s368 = scalar_lea.vmem %s269, 48
      %v369 = vld [vmem:[%s368] sm:$0xf]
      %v370 = vld [vmem:[%s368 + $0x4] sm:$0xf]
      %v371 = vld [vmem:[%s368 + $0x8] sm:$0xf]
      %v372 = vld [vmem:[%s368 + $0xc] sm:$0xf]
      %v373 = vld [vmem:[%s368 + $0x10] sm:$0xf]
      %v374 = vld [vmem:[%s368 + $0x14] sm:$0xf]
      %v375 = vld [vmem:[%s368 + $0x18] sm:$0xf]
      %v376 = vld [vmem:[%s368 + $0x1c] sm:$0xf]
      %v377 = vld [vmem:[%s368 + $0x20] sm:$0xf]
      %v378 = vld [vmem:[%s368 + $0x24] sm:$0xf]
      %v379 = vld [vmem:[%s368 + $0x28] sm:$0xf]
      %v380 = vld [vmem:[%s368 + $0x2c] sm:$0xf]
      %v413 = vunpack.c.l.b16 %v336
      %v414 = vunpack.c.l.b16 %v337
      %v415 = vunpack.c.l.b16 %v338
      %v416 = vunpack.c.l.b16 %v339
      %v417 = vunpack.c.l.b16 %v340
      %v418 = vunpack.c.l.b16 %v341
      %v419 = vunpack.c.l.b16 %v342
      %v420 = vunpack.c.l.b16 %v343
      %v421 = vunpack.c.l.b16 %v344
      %v422 = vunpack.c.l.b16 %v345
      %v423 = vunpack.c.l.b16 %v346
      %v424 = vunpack.c.l.b16 %v347
      %v425 = vunpack.c.l.b16 %v348
      %v426 = vunpack.c.l.b16 %v349
      %v427 = vunpack.c.l.b16 %v350
      %v428 = vunpack.c.l.b16 %v351
      %v429 = vunpack.c.l.b16 %v352
      %v430 = vunpack.c.l.b16 %v353
      %v431 = vunpack.c.l.b16 %v354
      %v432 = vunpack.c.l.b16 %v355
      %v433 = vunpack.c.l.b16 %v356
      %v434 = vunpack.c.l.b16 %v357
      %v435 = vunpack.c.l.b16 %v358
      %v436 = vunpack.c.l.b16 %v359
      %v437 = vunpack.c.l.b16 %v360
      %v438 = vunpack.c.l.b16 %v361
      %v439 = vunpack.c.l.b16 %v362
      %v440 = vunpack.c.l.b16 %v363
      %v441 = vunpack.c.l.b16 %v364
      %v442 = vunpack.c.l.b16 %v365
      %v443 = vunpack.c.l.b16 %v366
      %v444 = vunpack.c.l.b16 %v367
      %v445 = vpack.c.b16 %v414, %v413
      %v446 = vpack.c.b16 %v416, %v415
      %v447 = vpack.c.b16 %v418, %v417
      %v448 = vpack.c.b16 %v420, %v419
      %v449 = vpack.c.b16 %v422, %v421
      %v450 = vpack.c.b16 %v424, %v423
      %v451 = vpack.c.b16 %v426, %v425
      %v452 = vpack.c.b16 %v428, %v427
      %v453 = vpack.c.b16 %v430, %v429
      %v454 = vpack.c.b16 %v432, %v431
      %v455 = vpack.c.b16 %v434, %v433
      %v456 = vpack.c.b16 %v436, %v435
      %v457 = vpack.c.b16 %v438, %v437
      %v458 = vpack.c.b16 %v440, %v439
      %v459 = vpack.c.b16 %v442, %v441
      %v460 = vpack.c.b16 %v444, %v443
      %v473 = vunpack.c.l.b16 %v369
      %v474 = vunpack.c.l.b16 %v370
      %v475 = vunpack.c.l.b16 %v371
      %v476 = vunpack.c.l.b16 %v372
      %v477 = vunpack.c.l.b16 %v373
      %v478 = vunpack.c.l.b16 %v374
      %v479 = vunpack.c.l.b16 %v375
      %v480 = vunpack.c.l.b16 %v376
      %v481 = vunpack.c.l.b16 %v377
      %v482 = vunpack.c.l.b16 %v378
      %v483 = vunpack.c.l.b16 %v379
      %v484 = vunpack.c.l.b16 %v380
      %v485 = vpack.c.b16 %v474, %v473
      %v486 = vpack.c.b16 %v476, %v475
      %v487 = vpack.c.b16 %v478, %v477
      %v488 = vpack.c.b16 %v480, %v479
      %v489 = vpack.c.b16 %v482, %v481
      %v490 = vpack.c.b16 %v484, %v483
      %vm497 = vcmask 785408
      %v499 = vsel %vm497, %v445, 0
      %v502 = vsel %vm497, %v446, 0
      %v505 = vsel %vm497, %v447, 0
      %v508 = vsel %vm497, %v448, 0
      %v511 = vsel %vm497, %v449, 0
      %v514 = vsel %vm497, %v450, 0
      %v517 = vsel %vm497, %v451, 0
      %v520 = vsel %vm497, %v452, 0
      %v523 = vsel %vm497, %v453, 0
      %v526 = vsel %vm497, %v454, 0
      %v529 = vsel %vm497, %v455, 0
      %v532 = vsel %vm497, %v456, 0
      %v535 = vsel %vm497, %v457, 0
      %v538 = vsel %vm497, %v458, 0
      %v541 = vsel %vm497, %v459, 0
      %v544 = vsel %vm497, %v460, 0
      %546 = vmatpush.bf16.msra.mxu0 0
      %547 = vmatpush.bf16.msra.mxu0 0
      %548 = vmatpush.bf16.msra.mxu0 %v490
      %549 = vmatpush.bf16.msra.mxu0 %v489
      %550 = vmatpush.bf16.msra.mxu0 %v488
      %551 = vmatpush.bf16.msra.mxu0 %v487
      %552 = vmatpush.bf16.msra.mxu0 %v486
      %553 = vmatpush.bf16.msra.mxu0 %v485
      %554 = vmatmul.bf16.gmra.mxu0 %v499
      %v555 = vpop.f32.mrf.mxu0
      %v556 = vadd.f32 0.0, %v555
      %v557 = vpop.f32.mrf.mxu0
      %v558 = vadd.f32 0.0, %v557
      %559 = vmatmul.bf16.gmra.mxu0 %v502
      %v560 = vpop.f32.mrf.mxu0
      %v561 = vadd.f32 0.0, %v560
      %v562 = vpop.f32.mrf.mxu0
      %v563 = vadd.f32 0.0, %v562
      %564 = vmatmul.bf16.gmra.mxu0 %v505
      %v565 = vpop.f32.mrf.mxu0
      %v566 = vadd.f32 0.0, %v565
      %v567 = vpop.f32.mrf.mxu0
      %v568 = vadd.f32 0.0, %v567
      %569 = vmatmul.bf16.gmra.mxu0 %v508
      %v570 = vpop.f32.mrf.mxu0
      %v571 = vadd.f32 0.0, %v570
      %v572 = vpop.f32.mrf.mxu0
      %v573 = vadd.f32 0.0, %v572
      %574 = vmatmul.bf16.gmra.mxu0 %v511
      %v575 = vpop.f32.mrf.mxu0
      %v576 = vadd.f32 0.0, %v575
      %v577 = vpop.f32.mrf.mxu0
      %v578 = vadd.f32 0.0, %v577
      %579 = vmatmul.bf16.gmra.mxu0 %v514
      %v580 = vpop.f32.mrf.mxu0
      %v581 = vadd.f32 0.0, %v580
      %v582 = vpop.f32.mrf.mxu0
      %v583 = vadd.f32 0.0, %v582
      %584 = vmatmul.bf16.gmra.mxu0 %v517
      %v585 = vpop.f32.mrf.mxu0
      %v586 = vadd.f32 0.0, %v585
      %v587 = vpop.f32.mrf.mxu0
      %v588 = vadd.f32 0.0, %v587
      %589 = vmatmul.bf16.gmra.mxu0 %v520
      %v590 = vpop.f32.mrf.mxu0
      %v591 = vadd.f32 0.0, %v590
      %v592 = vpop.f32.mrf.mxu0
      %v593 = vadd.f32 0.0, %v592
      %594 = vmatmul.bf16.gmra.mxu0 %v523
      %v595 = vpop.f32.mrf.mxu0
      %v596 = vadd.f32 0.0, %v595
      %v597 = vpop.f32.mrf.mxu0
      %v598 = vadd.f32 0.0, %v597
      %599 = vmatmul.bf16.gmra.mxu0 %v526
      %v600 = vpop.f32.mrf.mxu0
      %v601 = vadd.f32 0.0, %v600
      %v602 = vpop.f32.mrf.mxu0
      %v603 = vadd.f32 0.0, %v602
      %604 = vmatmul.bf16.gmra.mxu0 %v529
      %v605 = vpop.f32.mrf.mxu0
      %v606 = vadd.f32 0.0, %v605
      %v607 = vpop.f32.mrf.mxu0
      %v608 = vadd.f32 0.0, %v607
      %609 = vmatmul.bf16.gmra.mxu0 %v532
      %v610 = vpop.f32.mrf.mxu0
      %v611 = vadd.f32 0.0, %v610
      %v612 = vpop.f32.mrf.mxu0
      %v613 = vadd.f32 0.0, %v612
      %614 = vmatmul.bf16.gmra.mxu0 %v535
      %v615 = vpop.f32.mrf.mxu0
      %v616 = vadd.f32 0.0, %v615
      %v617 = vpop.f32.mrf.mxu0
      %v618 = vadd.f32 0.0, %v617
      %619 = vmatmul.bf16.gmra.mxu0 %v538
      %v620 = vpop.f32.mrf.mxu0
      %v621 = vadd.f32 0.0, %v620
      %v622 = vpop.f32.mrf.mxu0
      %v623 = vadd.f32 0.0, %v622
      %624 = vmatmul.bf16.gmra.mxu0 %v541
      %v625 = vpop.f32.mrf.mxu0
      %v626 = vadd.f32 0.0, %v625
      %v627 = vpop.f32.mrf.mxu0
      %v628 = vadd.f32 0.0, %v627
      %629 = vmatmul.bf16.gmra.mxu0 %v544
      %v630 = vpop.f32.mrf.mxu0
      %v631 = vadd.f32 0.0, %v630
      %v632 = vpop.f32.mrf.mxu0
      %v633 = vadd.f32 0.0, %v632
      %634 = vdwg.mxu0
      %v667 = vunpack.c.l.b16 %v291
      %v668 = vunpack.c.l.b16 %v292
      %v669 = vunpack.c.l.b16 %v293
      %v670 = vunpack.c.l.b16 %v294
      %v671 = vunpack.c.l.b16 %v295
      %v672 = vunpack.c.l.b16 %v296
      %v673 = vunpack.c.l.b16 %v297
      %v674 = vunpack.c.l.b16 %v298
      %v675 = vunpack.c.l.b16 %v299
      %v676 = vunpack.c.l.b16 %v300
      %v677 = vunpack.c.l.b16 %v301
      %v678 = vunpack.c.l.b16 %v302
      %v679 = vunpack.c.l.b16 %v303
      %v680 = vunpack.c.l.b16 %v304
      %v681 = vunpack.c.l.b16 %v305
      %v682 = vunpack.c.l.b16 %v306
      %v683 = vunpack.c.l.b16 %v307
      %v684 = vunpack.c.l.b16 %v308
      %v685 = vunpack.c.l.b16 %v309
      %v686 = vunpack.c.l.b16 %v310
      %v687 = vunpack.c.l.b16 %v311
      %v688 = vunpack.c.l.b16 %v312
      %v689 = vunpack.c.l.b16 %v313
      %v690 = vunpack.c.l.b16 %v314
      %v691 = vunpack.c.l.b16 %v315
      %v692 = vunpack.c.l.b16 %v316
      %v693 = vunpack.c.l.b16 %v317
      %v694 = vunpack.c.l.b16 %v318
      %v695 = vunpack.c.l.b16 %v319
      %v696 = vunpack.c.l.b16 %v320
      %v697 = vunpack.c.l.b16 %v321
      %v698 = vunpack.c.l.b16 %v322
      %v699 = vpack.c.b16 %v668, %v667
      %v700 = vpack.c.b16 %v670, %v669
      %v701 = vpack.c.b16 %v672, %v671
      %v702 = vpack.c.b16 %v674, %v673
      %v703 = vpack.c.b16 %v676, %v675
      %v704 = vpack.c.b16 %v678, %v677
      %v705 = vpack.c.b16 %v680, %v679
      %v706 = vpack.c.b16 %v682, %v681
      %v707 = vpack.c.b16 %v684, %v683
      %v708 = vpack.c.b16 %v686, %v685
      %v709 = vpack.c.b16 %v688, %v687
      %v710 = vpack.c.b16 %v690, %v689
      %v711 = vpack.c.b16 %v692, %v691
      %v712 = vpack.c.b16 %v694, %v693
      %v713 = vpack.c.b16 %v696, %v695
      %v714 = vpack.c.b16 %v698, %v697
      %v727 = vunpack.c.l.b16 %v323
      %v728 = vunpack.c.l.b16 %v324
      %v729 = vunpack.c.l.b16 %v325
      %v730 = vunpack.c.l.b16 %v326
      %v731 = vunpack.c.l.b16 %v327
      %v732 = vunpack.c.l.b16 %v328
      %v733 = vunpack.c.l.b16 %v329
      %v734 = vunpack.c.l.b16 %v330
      %v735 = vunpack.c.l.b16 %v331
      %v736 = vunpack.c.l.b16 %v332
      %v737 = vunpack.c.l.b16 %v333
      %v738 = vunpack.c.l.b16 %v334
      %v739 = vpack.c.b16 %v728, %v727
      %v740 = vpack.c.b16 %v730, %v729
      %v741 = vpack.c.b16 %v732, %v731
      %v742 = vpack.c.b16 %v734, %v733
      %v743 = vpack.c.b16 %v736, %v735
      %v744 = vpack.c.b16 %v738, %v737
      %v752 = vsel %vm497, %v699, 0
      %v755 = vsel %vm497, %v700, 0
      %v758 = vsel %vm497, %v701, 0
      %v761 = vsel %vm497, %v702, 0
      %v764 = vsel %vm497, %v703, 0
      %v767 = vsel %vm497, %v704, 0
      %v770 = vsel %vm497, %v705, 0
      %v773 = vsel %vm497, %v706, 0
      %v776 = vsel %vm497, %v707, 0
      %v779 = vsel %vm497, %v708, 0
      %v782 = vsel %vm497, %v709, 0
      %v785 = vsel %vm497, %v710, 0
      %v788 = vsel %vm497, %v711, 0
      %v791 = vsel %vm497, %v712, 0
      %v794 = vsel %vm497, %v713, 0
      %v797 = vsel %vm497, %v714, 0
      %799 = vmatpush.bf16.msra.mxu0 0
      %800 = vmatpush.bf16.msra.mxu0 0
      %801 = vmatpush.bf16.msra.mxu0 %v744
      %802 = vmatpush.bf16.msra.mxu0 %v743
      %803 = vmatpush.bf16.msra.mxu0 %v742
      %804 = vmatpush.bf16.msra.mxu0 %v741
      %805 = vmatpush.bf16.msra.mxu0 %v740
      %806 = vmatpush.bf16.msra.mxu0 %v739
      %807 = vmatmul.bf16.gmra.mxu0 %v752
      %v808 = vpop.f32.mrf.mxu0
      %v809 = vadd.f32 %v556, %v808
      %v810 = vpop.f32.mrf.mxu0
      %v811 = vadd.f32 %v558, %v810
      %812 = vmatmul.bf16.gmra.mxu0 %v755
      %v813 = vpop.f32.mrf.mxu0
      %v814 = vadd.f32 %v561, %v813
      %v815 = vpop.f32.mrf.mxu0
      %v816 = vadd.f32 %v563, %v815
      %817 = vmatmul.bf16.gmra.mxu0 %v758
      %v818 = vpop.f32.mrf.mxu0
      %v819 = vadd.f32 %v566, %v818
      %v820 = vpop.f32.mrf.mxu0
      %v821 = vadd.f32 %v568, %v820
      %822 = vmatmul.bf16.gmra.mxu0 %v761
      %v823 = vpop.f32.mrf.mxu0
      %v824 = vadd.f32 %v571, %v823
      %v825 = vpop.f32.mrf.mxu0
      %v826 = vadd.f32 %v573, %v825
      %827 = vmatmul.bf16.gmra.mxu0 %v764
      %v828 = vpop.f32.mrf.mxu0
      %v829 = vadd.f32 %v576, %v828
      %v830 = vpop.f32.mrf.mxu0
      %v831 = vadd.f32 %v578, %v830
      %832 = vmatmul.bf16.gmra.mxu0 %v767
      %v833 = vpop.f32.mrf.mxu0
      %v834 = vadd.f32 %v581, %v833
      %v835 = vpop.f32.mrf.mxu0
      %v836 = vadd.f32 %v583, %v835
      %837 = vmatmul.bf16.gmra.mxu0 %v770
      %v838 = vpop.f32.mrf.mxu0
      %v839 = vadd.f32 %v586, %v838
      %v840 = vpop.f32.mrf.mxu0
      %v841 = vadd.f32 %v588, %v840
      %842 = vmatmul.bf16.gmra.mxu0 %v773
      %v843 = vpop.f32.mrf.mxu0
      %v844 = vadd.f32 %v591, %v843
      %v845 = vpop.f32.mrf.mxu0
      %v846 = vadd.f32 %v593, %v845
      %847 = vmatmul.bf16.gmra.mxu0 %v776
      %v848 = vpop.f32.mrf.mxu0
      %v849 = vadd.f32 %v596, %v848
      %v850 = vpop.f32.mrf.mxu0
      %v851 = vadd.f32 %v598, %v850
      %852 = vmatmul.bf16.gmra.mxu0 %v779
      %v853 = vpop.f32.mrf.mxu0
      %v854 = vadd.f32 %v601, %v853
      %v855 = vpop.f32.mrf.mxu0
      %v856 = vadd.f32 %v603, %v855
      %857 = vmatmul.bf16.gmra.mxu0 %v782
      %v858 = vpop.f32.mrf.mxu0
      %v859 = vadd.f32 %v606, %v858
      %v860 = vpop.f32.mrf.mxu0
      %v861 = vadd.f32 %v608, %v860
      %862 = vmatmul.bf16.gmra.mxu0 %v785
      %v863 = vpop.f32.mrf.mxu0
      %v864 = vadd.f32 %v611, %v863
      %v865 = vpop.f32.mrf.mxu0
      %v866 = vadd.f32 %v613, %v865
      %867 = vmatmul.bf16.gmra.mxu0 %v788
      %v868 = vpop.f32.mrf.mxu0
      %v869 = vadd.f32 %v616, %v868
      %v870 = vpop.f32.mrf.mxu0
      %v871 = vadd.f32 %v618, %v870
      %872 = vmatmul.bf16.gmra.mxu0 %v791
      %v873 = vpop.f32.mrf.mxu0
      %v874 = vadd.f32 %v621, %v873
      %v875 = vpop.f32.mrf.mxu0
      %v876 = vadd.f32 %v623, %v875
      %877 = vmatmul.bf16.gmra.mxu0 %v794
      %v878 = vpop.f32.mrf.mxu0
      %v879 = vadd.f32 %v626, %v878
      %v880 = vpop.f32.mrf.mxu0
      %v881 = vadd.f32 %v628, %v880
      %882 = vmatmul.bf16.gmra.mxu0 %v797
      %v883 = vpop.f32.mrf.mxu0
      %v884 = vadd.f32 %v631, %v883
      %v885 = vpop.f32.mrf.mxu0
      %v886 = vadd.f32 %v633, %v885
      %887 = vdwg.mxu0
      %s888 = scalar_lea.vmem %s264, 16
      %v889 = vld [vmem:[%s888] sm:$0xf]
      %v890 = vld [vmem:[%s888 + $0x4] sm:$0xf]
      %v891 = vld [vmem:[%s888 + $0x8] sm:$0xf]
      %v892 = vld [vmem:[%s888 + $0xc] sm:$0xf]
      %v893 = vld [vmem:[%s888 + $0x10] sm:$0xf]
      %v894 = vld [vmem:[%s888 + $0x14] sm:$0xf]
      %v895 = vld [vmem:[%s888 + $0x18] sm:$0xf]
      %v896 = vld [vmem:[%s888 + $0x1c] sm:$0xf]
      %v897 = vld [vmem:[%s888 + $0x20] sm:$0xf]
      %v898 = vld [vmem:[%s888 + $0x24] sm:$0xf]
      %v899 = vld [vmem:[%s888 + $0x28] sm:$0xf]
      %v900 = vld [vmem:[%s888 + $0x2c] sm:$0xf]
      %v901 = vld [vmem:[%s888 + $0x30] sm:$0xf]
      %v902 = vld [vmem:[%s888 + $0x34] sm:$0xf]
      %v903 = vld [vmem:[%s888 + $0x38] sm:$0xf]
      %v904 = vld [vmem:[%s888 + $0x3c] sm:$0xf]
      %v905 = vld [vmem:[%s888 + $0x40] sm:$0xf]
      %v906 = vld [vmem:[%s888 + $0x44] sm:$0xf]
      %v907 = vld [vmem:[%s888 + $0x48] sm:$0xf]
      %v908 = vld [vmem:[%s888 + $0x4c] sm:$0xf]
      %v909 = vld [vmem:[%s888 + $0x50] sm:$0xf]
      %v910 = vld [vmem:[%s888 + $0x54] sm:$0xf]
      %v911 = vld [vmem:[%s888 + $0x58] sm:$0xf]
      %v912 = vld [vmem:[%s888 + $0x5c] sm:$0xf]
      %v913 = vld [vmem:[%s888 + $0x60] sm:$0xf]
      %v914 = vld [vmem:[%s888 + $0x64] sm:$0xf]
      %v915 = vld [vmem:[%s888 + $0x68] sm:$0xf]
      %v916 = vld [vmem:[%s888 + $0x6c] sm:$0xf]
      %v917 = vld [vmem:[%s888 + $0x70] sm:$0xf]
      %v918 = vld [vmem:[%s888 + $0x74] sm:$0xf]
      %v919 = vld [vmem:[%s888 + $0x78] sm:$0xf]
      %v920 = vld [vmem:[%s888 + $0x7c] sm:$0xf]
      %s921 = scalar_lea.vmem %s269, 96
      %v922 = vld [vmem:[%s921] sm:$0xf]
      %v923 = vld [vmem:[%s921 + $0x4] sm:$0xf]
      %v924 = vld [vmem:[%s921 + $0x8] sm:$0xf]
      %v925 = vld [vmem:[%s921 + $0xc] sm:$0xf]
      %v926 = vld [vmem:[%s921 + $0x10] sm:$0xf]
      %v927 = vld [vmem:[%s921 + $0x14] sm:$0xf]
      %v928 = vld [vmem:[%s921 + $0x18] sm:$0xf]
      %v929 = vld [vmem:[%s921 + $0x1c] sm:$0xf]
      %v930 = vld [vmem:[%s921 + $0x20] sm:$0xf]
      %v931 = vld [vmem:[%s921 + $0x24] sm:$0xf]
      %v932 = vld [vmem:[%s921 + $0x28] sm:$0xf]
      %v933 = vld [vmem:[%s921 + $0x2c] sm:$0xf]
      %v966 = vunpack.c.l.b16 %v889
      %v967 = vunpack.c.l.b16 %v890
      %v968 = vunpack.c.l.b16 %v891
      %v969 = vunpack.c.l.b16 %v892
      %v970 = vunpack.c.l.b16 %v893
      %v971 = vunpack.c.l.b16 %v894
      %v972 = vunpack.c.l.b16 %v895
      %v973 = vunpack.c.l.b16 %v896
      %v974 = vunpack.c.l.b16 %v897
      %v975 = vunpack.c.l.b16 %v898
      %v976 = vunpack.c.l.b16 %v899
      %v977 = vunpack.c.l.b16 %v900
      %v978 = vunpack.c.l.b16 %v901
      %v979 = vunpack.c.l.b16 %v902
      %v980 = vunpack.c.l.b16 %v903
      %v981 = vunpack.c.l.b16 %v904
      %v982 = vunpack.c.l.b16 %v905
      %v983 = vunpack.c.l.b16 %v906
      %v984 = vunpack.c.l.b16 %v907
      %v985 = vunpack.c.l.b16 %v908
      %v986 = vunpack.c.l.b16 %v909
      %v987 = vunpack.c.l.b16 %v910
      %v988 = vunpack.c.l.b16 %v911
      %v989 = vunpack.c.l.b16 %v912
      %v990 = vunpack.c.l.b16 %v913
      %v991 = vunpack.c.l.b16 %v914
      %v992 = vunpack.c.l.b16 %v915
      %v993 = vunpack.c.l.b16 %v916
      %v994 = vunpack.c.l.b16 %v917
      %v995 = vunpack.c.l.b16 %v918
      %v996 = vunpack.c.l.b16 %v919
      %v997 = vunpack.c.l.b16 %v920
      %v998 = vpack.c.b16 %v967, %v966
      %v999 = vpack.c.b16 %v969, %v968
      %v1000 = vpack.c.b16 %v971, %v970
      %v1001 = vpack.c.b16 %v973, %v972
      %v1002 = vpack.c.b16 %v975, %v974
      %v1003 = vpack.c.b16 %v977, %v976
      %v1004 = vpack.c.b16 %v979, %v978
      %v1005 = vpack.c.b16 %v981, %v980
      %v1006 = vpack.c.b16 %v983, %v982
      %v1007 = vpack.c.b16 %v985, %v984
      %v1008 = vpack.c.b16 %v987, %v986
      %v1009 = vpack.c.b16 %v989, %v988
      %v1010 = vpack.c.b16 %v991, %v990
      %v1011 = vpack.c.b16 %v993, %v992
      %v1012 = vpack.c.b16 %v995, %v994
      %v1013 = vpack.c.b16 %v997, %v996
      %v1026 = vunpack.c.l.b16 %v922
      %v1027 = vunpack.c.l.b16 %v923
      %v1028 = vunpack.c.l.b16 %v924
      %v1029 = vunpack.c.l.b16 %v925
      %v1030 = vunpack.c.l.b16 %v926
      %v1031 = vunpack.c.l.b16 %v927
      %v1032 = vunpack.c.l.b16 %v928
      %v1033 = vunpack.c.l.b16 %v929
      %v1034 = vunpack.c.l.b16 %v930
      %v1035 = vunpack.c.l.b16 %v931
      %v1036 = vunpack.c.l.b16 %v932
      %v1037 = vunpack.c.l.b16 %v933
      %v1038 = vpack.c.b16 %v1027, %v1026
      %v1039 = vpack.c.b16 %v1029, %v1028
      %v1040 = vpack.c.b16 %v1031, %v1030
      %v1041 = vpack.c.b16 %v1033, %v1032
      %v1042 = vpack.c.b16 %v1035, %v1034
      %v1043 = vpack.c.b16 %v1037, %v1036
      %v1051 = vsel %vm497, %v998, 0
      %v1054 = vsel %vm497, %v999, 0
      %v1057 = vsel %vm497, %v1000, 0
      %v1060 = vsel %vm497, %v1001, 0
      %v1063 = vsel %vm497, %v1002, 0
      %v1066 = vsel %vm497, %v1003, 0
      %v1069 = vsel %vm497, %v1004, 0
      %v1072 = vsel %vm497, %v1005, 0
      %v1075 = vsel %vm497, %v1006, 0
      %v1078 = vsel %vm497, %v1007, 0
      %v1081 = vsel %vm497, %v1008, 0
      %v1084 = vsel %vm497, %v1009, 0
      %v1087 = vsel %vm497, %v1010, 0
      %v1090 = vsel %vm497, %v1011, 0
      %v1093 = vsel %vm497, %v1012, 0
      %v1096 = vsel %vm497, %v1013, 0
      %1098 = vmatpush.bf16.msra.mxu0 0
      %1099 = vmatpush.bf16.msra.mxu0 0
      %1100 = vmatpush.bf16.msra.mxu0 %v1043
      %1101 = vmatpush.bf16.msra.mxu0 %v1042
      %1102 = vmatpush.bf16.msra.mxu0 %v1041
      %1103 = vmatpush.bf16.msra.mxu0 %v1040
      %1104 = vmatpush.bf16.msra.mxu0 %v1039
      %1105 = vmatpush.bf16.msra.mxu0 %v1038
      %1106 = vmatmul.bf16.gmra.mxu0 %v1051
      %v1107 = vpop.f32.mrf.mxu0
      %v1108 = vadd.f32 0.0, %v1107
      %v1109 = vpop.f32.mrf.mxu0
      %v1110 = vadd.f32 0.0, %v1109
      %1111 = vmatmul.bf16.gmra.mxu0 %v1054
      %v1112 = vpop.f32.mrf.mxu0
      %v1113 = vadd.f32 0.0, %v1112
      %v1114 = vpop.f32.mrf.mxu0
      %v1115 = vadd.f32 0.0, %v1114
      %1116 = vmatmul.bf16.gmra.mxu0 %v1057
      %v1117 = vpop.f32.mrf.mxu0
      %v1118 = vadd.f32 0.0, %v1117
      %v1119 = vpop.f32.mrf.mxu0
      %v1120 = vadd.f32 0.0, %v1119
      %1121 = vmatmul.bf16.gmra.mxu0 %v1060
      %v1122 = vpop.f32.mrf.mxu0
      %v1123 = vadd.f32 0.0, %v1122
      %v1124 = vpop.f32.mrf.mxu0
      %v1125 = vadd.f32 0.0, %v1124
      %1126 = vmatmul.bf16.gmra.mxu0 %v1063
      %v1127 = vpop.f32.mrf.mxu0
      %v1128 = vadd.f32 0.0, %v1127
      %v1129 = vpop.f32.mrf.mxu0
      %v1130 = vadd.f32 0.0, %v1129
      %1131 = vmatmul.bf16.gmra.mxu0 %v1066
      %v1132 = vpop.f32.mrf.mxu0
      %v1133 = vadd.f32 0.0, %v1132
      %v1134 = vpop.f32.mrf.mxu0
      %v1135 = vadd.f32 0.0, %v1134
      %1136 = vmatmul.bf16.gmra.mxu0 %v1069
      %v1137 = vpop.f32.mrf.mxu0
      %v1138 = vadd.f32 0.0, %v1137
      %v1139 = vpop.f32.mrf.mxu0
      %v1140 = vadd.f32 0.0, %v1139
      %1141 = vmatmul.bf16.gmra.mxu0 %v1072
      %v1142 = vpop.f32.mrf.mxu0
      %v1143 = vadd.f32 0.0, %v1142
      %v1144 = vpop.f32.mrf.mxu0
      %v1145 = vadd.f32 0.0, %v1144
      %1146 = vmatmul.bf16.gmra.mxu0 %v1075
      %v1147 = vpop.f32.mrf.mxu0
      %v1148 = vadd.f32 0.0, %v1147
      %v1149 = vpop.f32.mrf.mxu0
      %v1150 = vadd.f32 0.0, %v1149
      %1151 = vmatmul.bf16.gmra.mxu0 %v1078
      %v1152 = vpop.f32.mrf.mxu0
      %v1153 = vadd.f32 0.0, %v1152
      %v1154 = vpop.f32.mrf.mxu0
      %v1155 = vadd.f32 0.0, %v1154
      %1156 = vmatmul.bf16.gmra.mxu0 %v1081
      %v1157 = vpop.f32.mrf.mxu0
      %v1158 = vadd.f32 0.0, %v1157
      %v1159 = vpop.f32.mrf.mxu0
      %v1160 = vadd.f32 0.0, %v1159
      %1161 = vmatmul.bf16.gmra.mxu0 %v1084
      %v1162 = vpop.f32.mrf.mxu0
      %v1163 = vadd.f32 0.0, %v1162
      %v1164 = vpop.f32.mrf.mxu0
      %v1165 = vadd.f32 0.0, %v1164
      %1166 = vmatmul.bf16.gmra.mxu0 %v1087
      %v1167 = vpop.f32.mrf.mxu0
      %v1168 = vadd.f32 0.0, %v1167
      %v1169 = vpop.f32.mrf.mxu0
      %v1170 = vadd.f32 0.0, %v1169
      %1171 = vmatmul.bf16.gmra.mxu0 %v1090
      %v1172 = vpop.f32.mrf.mxu0
      %v1173 = vadd.f32 0.0, %v1172
      %v1174 = vpop.f32.mrf.mxu0
      %v1175 = vadd.f32 0.0, %v1174
      %1176 = vmatmul.bf16.gmra.mxu0 %v1093
      %v1177 = vpop.f32.mrf.mxu0
      %v1178 = vadd.f32 0.0, %v1177
      %v1179 = vpop.f32.mrf.mxu0
      %v1180 = vadd.f32 0.0, %v1179
      %1181 = vmatmul.bf16.gmra.mxu0 %v1096
      %v1182 = vpop.f32.mrf.mxu0
      %v1183 = vadd.f32 0.0, %v1182
      %v1184 = vpop.f32.mrf.mxu0
      %v1185 = vadd.f32 0.0, %v1184
      %1186 = vdwg.mxu0
      %v1187 = vadd.f32 %v809, %v1108
      %v1188 = vadd.f32 %v811, %v1110
      %v1189 = vadd.f32 %v814, %v1113
      %v1190 = vadd.f32 %v816, %v1115
      %v1191 = vadd.f32 %v819, %v1118
      %v1192 = vadd.f32 %v821, %v1120
      %v1193 = vadd.f32 %v824, %v1123
      %v1194 = vadd.f32 %v826, %v1125
      %v1195 = vadd.f32 %v829, %v1128
      %v1196 = vadd.f32 %v831, %v1130
      %v1197 = vadd.f32 %v834, %v1133
      %v1198 = vadd.f32 %v836, %v1135
      %v1199 = vadd.f32 %v839, %v1138
      %v1200 = vadd.f32 %v841, %v1140
      %v1201 = vadd.f32 %v844, %v1143
      %v1202 = vadd.f32 %v846, %v1145
      %v1203 = vadd.f32 %v849, %v1148
      %v1204 = vadd.f32 %v851, %v1150
      %v1205 = vadd.f32 %v854, %v1153
      %v1206 = vadd.f32 %v856, %v1155
      %v1207 = vadd.f32 %v859, %v1158
      %v1208 = vadd.f32 %v861, %v1160
      %v1209 = vadd.f32 %v864, %v1163
      %v1210 = vadd.f32 %v866, %v1165
      %v1211 = vadd.f32 %v869, %v1168
      %v1212 = vadd.f32 %v871, %v1170
      %v1213 = vadd.f32 %v874, %v1173
      %v1214 = vadd.f32 %v876, %v1175
      %v1215 = vadd.f32 %v879, %v1178
      %v1216 = vadd.f32 %v881, %v1180
      %v1217 = vadd.f32 %v884, %v1183
      %v1218 = vadd.f32 %v886, %v1185
      %v1219 = vld [vmem:[%s272] sm:$0x1]
      %v1221 = vperm.slane %v1219, 0
      %v1223 = vmul.f32 %v1187, %v1221
      %v1224 = vmul.f32 %v1188, %v1221
      %v1225 = vmul.f32 %v1189, %v1221
      %v1226 = vmul.f32 %v1190, %v1221
      %v1227 = vmul.f32 %v1191, %v1221
      %v1228 = vmul.f32 %v1192, %v1221
      %v1229 = vmul.f32 %v1193, %v1221
      %v1230 = vmul.f32 %v1194, %v1221
      %v1231 = vmul.f32 %v1195, %v1221
      %v1232 = vmul.f32 %v1196, %v1221
      %v1233 = vmul.f32 %v1197, %v1221
      %v1234 = vmul.f32 %v1198, %v1221
      %v1235 = vmul.f32 %v1199, %v1221
      %v1236 = vmul.f32 %v1200, %v1221
      %v1237 = vmul.f32 %v1201, %v1221
      %v1238 = vmul.f32 %v1202, %v1221
      %v1239 = vmul.f32 %v1203, %v1221
      %v1240 = vmul.f32 %v1204, %v1221
      %v1241 = vmul.f32 %v1205, %v1221
      %v1242 = vmul.f32 %v1206, %v1221
      %v1243 = vmul.f32 %v1207, %v1221
      %v1244 = vmul.f32 %v1208, %v1221
      %v1245 = vmul.f32 %v1209, %v1221
      %v1246 = vmul.f32 %v1210, %v1221
      %v1247 = vmul.f32 %v1211, %v1221
      %v1248 = vmul.f32 %v1212, %v1221
      %v1249 = vmul.f32 %v1213, %v1221
      %v1250 = vmul.f32 %v1214, %v1221
      %v1251 = vmul.f32 %v1215, %v1221
      %v1252 = vmul.f32 %v1216, %v1221
      %v1253 = vmul.f32 %v1217, %v1221
      %v1254 = vmul.f32 %v1218, %v1221
      %v1255 = vld [vmem:[%s275] sm:$0x1]
      %v1257 = vperm.slane %v1255, 0
      %v1259 = vadd.f32 %v1223, %v1257
      %v1260 = vadd.f32 %v1224, %v1257
      %v1261 = vadd.f32 %v1225, %v1257
      %v1262 = vadd.f32 %v1226, %v1257
      %v1263 = vadd.f32 %v1227, %v1257
      %v1264 = vadd.f32 %v1228, %v1257
      %v1265 = vadd.f32 %v1229, %v1257
      %v1266 = vadd.f32 %v1230, %v1257
      %v1267 = vadd.f32 %v1231, %v1257
      %v1268 = vadd.f32 %v1232, %v1257
      %v1269 = vadd.f32 %v1233, %v1257
      %v1270 = vadd.f32 %v1234, %v1257
      %v1271 = vadd.f32 %v1235, %v1257
      %v1272 = vadd.f32 %v1236, %v1257
      %v1273 = vadd.f32 %v1237, %v1257
      %v1274 = vadd.f32 %v1238, %v1257
      %v1275 = vadd.f32 %v1239, %v1257
      %v1276 = vadd.f32 %v1240, %v1257
      %v1277 = vadd.f32 %v1241, %v1257
      %v1278 = vadd.f32 %v1242, %v1257
      %v1279 = vadd.f32 %v1243, %v1257
      %v1280 = vadd.f32 %v1244, %v1257
      %v1281 = vadd.f32 %v1245, %v1257
      %v1282 = vadd.f32 %v1246, %v1257
      %v1283 = vadd.f32 %v1247, %v1257
      %v1284 = vadd.f32 %v1248, %v1257
      %v1285 = vadd.f32 %v1249, %v1257
      %v1286 = vadd.f32 %v1250, %v1257
      %v1287 = vadd.f32 %v1251, %v1257
      %v1288 = vadd.f32 %v1252, %v1257
      %v1289 = vadd.f32 %v1253, %v1257
      %v1290 = vadd.f32 %v1254, %v1257
      %v1291 = vmax.f32 %v1259, 0.0
      %v1292 = vmax.f32 %v1260, 0.0
      %v1293 = vmax.f32 %v1261, 0.0
      %v1294 = vmax.f32 %v1262, 0.0
      %v1295 = vmax.f32 %v1263, 0.0
      %v1296 = vmax.f32 %v1264, 0.0
      %v1297 = vmax.f32 %v1265, 0.0
      %v1298 = vmax.f32 %v1266, 0.0
      %v1299 = vmax.f32 %v1267, 0.0
      %v1300 = vmax.f32 %v1268, 0.0
      %v1301 = vmax.f32 %v1269, 0.0
      %v1302 = vmax.f32 %v1270, 0.0
      %v1303 = vmax.f32 %v1271, 0.0
      %v1304 = vmax.f32 %v1272, 0.0
      %v1305 = vmax.f32 %v1273, 0.0
      %v1306 = vmax.f32 %v1274, 0.0
      %v1307 = vmax.f32 %v1275, 0.0
      %v1308 = vmax.f32 %v1276, 0.0
      %v1309 = vmax.f32 %v1277, 0.0
      %v1310 = vmax.f32 %v1278, 0.0
      %v1311 = vmax.f32 %v1279, 0.0
      %v1312 = vmax.f32 %v1280, 0.0
      %v1313 = vmax.f32 %v1281, 0.0
      %v1314 = vmax.f32 %v1282, 0.0
      %v1315 = vmax.f32 %v1283, 0.0
      %v1316 = vmax.f32 %v1284, 0.0
      %v1317 = vmax.f32 %v1285, 0.0
      %v1318 = vmax.f32 %v1286, 0.0
      %v1319 = vmax.f32 %v1287, 0.0
      %v1320 = vmax.f32 %v1288, 0.0
      %v1321 = vmax.f32 %v1289, 0.0
      %v1322 = vmax.f32 %v1290, 0.0
      %1323 = vst [vmem:[%s288] sm:$0xff] %v1291
      %1324 = vst [vmem:[%s288 + $0x8] sm:$0xff] %v1292
      %1325 = vst [vmem:[%s288 + $0x10] sm:$0xff] %v1293
      %1326 = vst [vmem:[%s288 + $0x18] sm:$0xff] %v1294
      %1327 = vst [vmem:[%s288 + $0x20] sm:$0xff] %v1295
      %1328 = vst [vmem:[%s288 + $0x28] sm:$0xff] %v1296
      %1329 = vst [vmem:[%s288 + $0x30] sm:$0xff] %v1297
      %1330 = vst [vmem:[%s288 + $0x38] sm:$0xff] %v1298
      %1331 = vst [vmem:[%s288 + $0x40] sm:$0xff] %v1299
      %1332 = vst [vmem:[%s288 + $0x48] sm:$0xff] %v1300
      %1333 = vst [vmem:[%s288 + $0x50] sm:$0xff] %v1301
      %1334 = vst [vmem:[%s288 + $0x58] sm:$0xff] %v1302
      %1335 = vst [vmem:[%s288 + $0x60] sm:$0xff] %v1303
      %1336 = vst [vmem:[%s288 + $0x68] sm:$0xff] %v1304
      %1337 = vst [vmem:[%s288 + $0x70] sm:$0xff] %v1305
      %1338 = vst [vmem:[%s288 + $0x78] sm:$0xff] %v1306
      %1339 = vst [vmem:[%s288 + $0x80] sm:$0xff] %v1307
      %1340 = vst [vmem:[%s288 + $0x88] sm:$0xff] %v1308
      %1341 = vst [vmem:[%s288 + $0x90] sm:$0xff] %v1309
      %1342 = vst [vmem:[%s288 + $0x98] sm:$0xff] %v1310
      %1343 = vst [vmem:[%s288 + $0xa0] sm:$0xff] %v1311
      %1344 = vst [vmem:[%s288 + $0xa8] sm:$0xff] %v1312
      %1345 = vst [vmem:[%s288 + $0xb0] sm:$0xff] %v1313
      %1346 = vst [vmem:[%s288 + $0xb8] sm:$0xff] %v1314
      %1347 = vst [vmem:[%s288 + $0xc0] sm:$0xff] %v1315
      %1348 = vst [vmem:[%s288 + $0xc8] sm:$0xff] %v1316
      %1349 = vst [vmem:[%s288 + $0xd0] sm:$0xff] %v1317
      %1350 = vst [vmem:[%s288 + $0xd8] sm:$0xff] %v1318
      %1351 = vst [vmem:[%s288 + $0xe0] sm:$0xff] %v1319
      %1352 = vst [vmem:[%s288 + $0xe8] sm:$0xff] %v1320
      %1353 = vst [vmem:[%s288 + $0xf0] sm:$0xff] %v1321
      %1354 = vst [vmem:[%s288 + $0xf8] sm:$0xff] %v1322
      %s1355 = smul.u32 16, %s22
      %p1356 = scmp.lt.s32.totalorder %s20, 1
      %s1357 = scalar_select %p1356, %s20, 1
      %p1358 = scmp.lt.s32.totalorder %s1355, 15
      %s1359 = scalar_select %p1358, %s1355, 15
      %p1360 = scmp.lt.s32.totalorder %s21, 0
      %s1361 = scalar_select %p1360, %s21, 0
      %s1362 = smul.addr %s1359, 2
      %s1363 = sadd.s32 %s1361, %s1362
      %s1364 = smul.addr %s1357, 32
      %s1365 = sadd.s32 %s1363, %s1364
      %s1366 = smul.addr %s1365, 8
      %s1367 = scalar_lea.vmem %s4, %s1366
      // Predicated region
      $region37: #{double_conv.3} parent=35 // pred_check
        %p1368 = pneg %p162
      $region38: #{double_conv.3} parent=35 // pred_check_branch
        %1370 = sbr.rel (%p1368) target = $region40
      $region39: #{double_conv.3} parent=35 // pred_region
        %s1371 = smul.u32 16, %s22
      $region40: #{double_conv.3} parent=35 // pred_fallthru
        _
    $region36: #{double_conv.3} parent=5 // pred_fallthru
      _
    %p1372 = scmp.le.s32.totalorder 2, %s10
    // Predicated region
    $region41: #{double_conv.3} parent=5 // pred_check
      %p1373 = pneg %p1372
    $region42: #{double_conv.3} parent=5 // pred_check_branch
      %1375 = sbr.rel (%p1373) target = $region44
    $region43: #{double_conv.3} parent=5 // pred_region
      %s1376 = ssub.s32 %s10, 2
      // Predicated region
      $region45: #{double_conv.3} parent=43 // pred_check
        %p1377 = pneg %p168
      $region46: #{double_conv.3} parent=43 // pred_check_branch
        %1379 = sbr.rel (%p1377) target = $region48
      $region47: #{double_conv.3} parent=43 // pred_region
        %s1380 = smul.u32 16, %s25
        %p1381 = scmp.lt.s32.totalorder %s23, 1
        %s1382 = scalar_select %p1381, %s23, 1
        %p1383 = scmp.lt.s32.totalorder %s1380, 15
        %s1384 = scalar_select %p1383, %s1380, 15
        %p1385 = scmp.lt.s32.totalorder %s24, 0
        %s1386 = scalar_select %p1385, %s24, 0
        %s1387 = smul.addr %s1384, 2
        %s1388 = sadd.s32 %s1386, %s1387
        %s1389 = smul.addr %s1382, 32
        %s1390 = sadd.s32 %s1388, %s1389
        %s1391 = smul.addr %s1390, 8
        %s1392 = scalar_lea.vmem %s4, %s1391
      $region48: #{double_conv.3} parent=43 // pred_fallthru
        _
    $region44: #{double_conv.3} parent=5 // pred_fallthru
      _
  $region6: #{double_conv.3} parent=0 // loop_footer
    %s14 = sadd.s32 1, %s10
  $region7: #{double_conv.3} parent=0 // loop_footer_branch
    %9 = sbr.rel target = $region3
  $region8: #{double_conv.3} parent=0 // loop_exit
    _

</llo_original>
